<compile_context>
chip_gen: v7x
topology: tpu7x:2x2x1
jax: 0.10.0
libtpu: 0.0.40
codegen_flags: <defaults>
</compile_context>

<pallas_src>
import functools
import math

import jax
import jax.numpy as jnp
from jax.experimental import pallas as pl
from jax.experimental.pallas import tpu as pltpu


def _round_up(x, m):
    return ((x + m - 1) // m) * m


def _make_score_kernel(precision):
    """Kernel over one batch tile.

    ea_ref: [Da, TB]  (embedding side with the SMALLER dim)
    eb_ref: [Db, TB]  (embedding side with the larger dim)
    w_ref:  [Da, Db]  (composed metapath matrix, oriented so v = W @ eb)
    out_ref:[1,  TB]  per-edge raw scores
    """

    def kernel(ea_ref, eb_ref, w_ref, out_ref):
        v = jnp.dot(
            w_ref[...],
            eb_ref[...],
            preferred_element_type=jnp.float32,
            precision=precision,
        )  # [Da, TB] f32
        prod = ea_ref[...].astype(jnp.float32) * v
        out_ref[...] = jnp.sum(prod, axis=0, keepdims=True)

    return kernel


def _compose_path(rel_mats, d1):
    """W_path = W1 @ W2 @ ... @ Wk in f32 (tiny, one-time, HIGHEST precision)."""
    if not rel_mats:
        return jnp.eye(d1, dtype=jnp.float32)
    mats = [jnp.asarray(m, dtype=jnp.float32) for m in rel_mats]
    return functools.reduce(
        lambda a, b: jnp.dot(a, b, precision=jax.lax.Precision.HIGHEST), mats)


def bilinear_path_decoder_pallas(embeds1, embeds2, rel_mats, tile_b=4096,
                                 input_dtype=jnp.bfloat16, precision=None):
    """embeds1: [D1, B], embeds2: [Dk, B] (PyTorch column-major layout).
    rel_mats: list of [D_i, D_{i+1}] matrices along the metapath.
    Returns raw path scores, shape [B] (f32).

    input_dtype: storage/streaming dtype for the embeddings and composed
    weight (default bf16 -> ~2x HBM throughput; pass jnp.float32 together with
    precision=jax.lax.Precision.HIGHEST for bit-close validation)."""
    d1, b = embeds1.shape
    dk, b2 = embeds2.shape
    assert b == b2, (embeds1.shape, embeds2.shape)
    d = d1
    for m in rel_mats:
        assert m.shape[0] == d, (m.shape, d)
        d = m.shape[1]
    assert d == dk, (d, dk)

    # Small-batch bypass: padding B up to >=128 lanes wastes DMA/compute and
    # launch overhead dominates; use the exact pure-JAX reference path.
    if b < 256:
        act = jnp.asarray(embeds1, jnp.float32).T
        for m in rel_mats:
            act = jnp.dot(act, jnp.asarray(m, jnp.float32),
                          precision=jax.lax.Precision.HIGHEST)
        return jnp.sum(act.T * jnp.asarray(embeds2, jnp.float32), axis=0)

    # --- Wrapper-side glue -------------------------------------------------
    # One composed matrix for the whole metapath.
    w_path = _compose_path(rel_mats, d1)          # [D1, Dk] f32

    # Put the matmul on whichever side has the LARGER dim so the intermediate
    # (and the reduce) run over the smaller dim:  score = sum(ea * (W @ eb)).
    if d1 <= dk:
        ea, eb, w = embeds1, embeds2, w_path      # W: [D1, Dk]
    else:
        ea, eb, w = embeds2, embeds1, w_path.T    # W: [Dk, D1]
    da, db = w.shape

    ea = jnp.asarray(ea).astype(input_dtype)
    eb = jnp.asarray(eb).astype(input_dtype)
    w = w.astype(input_dtype)
    in_itemsize = jnp.dtype(input_dtype).itemsize

    # --- Batch tiling --------------------------------------------------------
    tile_b = max(128, (int(tile_b) // 128) * 128)
    b_r = _round_up(b, 128)
    tile_b = min(tile_b, b_r)
    # v7x: make sure the "parallel" grid axis has >= 2 tiles so both
    # TensorCores get work (harmless ~0.35us extra step on single-TC chips).
    if b_r >= 2 * 128:
        tile_b = min(tile_b, _round_up((b_r + 1) // 2, 128))
    b_pad = _round_up(b, tile_b)
    if b_pad != b:
        ea = jnp.pad(ea, ((0, 0), (0, b_pad - b)))
        eb = jnp.pad(eb, ((0, 0), (0, b_pad - b)))
    num_tiles = b_pad // tile_b

    in_specs = [
        pl.BlockSpec((da, tile_b), lambda i: (0, i)),   # ea tile (streamed)
        pl.BlockSpec((db, tile_b), lambda i: (0, i)),   # eb tile (streamed)
        pl.BlockSpec((da, db), lambda i: (0, 0)),       # composed weight (resident)
    ]

    # VMEM budget: double-buffered embed tiles + (default 2-deep) weight + out.
    vmem_needed = (
        2 * (da + db) * tile_b * in_itemsize
        + 2 * da * db * in_itemsize
        + 2 * tile_b * 4
    )
    vmem_limit = int(min(max(vmem_needed + (4 << 20), 16 << 20), 48 << 20))

    out = pl.pallas_call(
        _make_score_kernel(precision),
        out_shape=jax.ShapeDtypeStruct((1, b_pad), jnp.float32),
        grid_spec=pltpu.PrefetchScalarGridSpec(
            num_scalar_prefetch=0,
            grid=(num_tiles,),
            in_specs=in_specs,
            out_specs=pl.BlockSpec((1, tile_b), lambda i: (0, i)),
        ),
        compiler_params=pltpu.CompilerParams(
            dimension_semantics=("parallel",),
            vmem_limit_bytes=vmem_limit,
        ),
    )(ea, eb, w)
    return out[0, :b]


class BilinearPathDecoderPallas:
    """JAX/Pallas port of BilinearPathDecoder (bilinear metapath scoring).

    relations -- map mode -> list of (to_mode, rel_name) outgoing edge types
    dims      -- map mode -> embedding dimension
    Note: the PyTorch module builds a Sigmoid but never applies it in forward();
    we mirror forward() exactly (raw scores).
    """

    def __init__(self, key, relations, dims):
        self.relations = relations
        self.dims = dims
        self.mats = {}
        rel_list = []
        for r1 in relations:
            for r2 in relations[r1]:
                rel_list.append((r1, r2[1], r2[0]))
        keys = jax.random.split(key, max(len(rel_list), 1))
        for k, rel in zip(keys, rel_list):
            d_from, d_to = dims[rel[0]], dims[rel[2]]
            # torch.nn.init.xavier_uniform on a (d_from, d_to) matrix.
            bound = math.sqrt(6.0 / (d_from + d_to))
            self.mats[rel] = jax.random.uniform(
                k, (d_from, d_to), jnp.float32, -bound, bound)

    def forward(self, embeds1, embeds2, rels, tile_b=4096,
                input_dtype=jnp.bfloat16, precision=None):
        return bilinear_path_decoder_pallas(
            embeds1, embeds2, [self.mats[r] for r in rels],
            tile_b=tile_b, input_dtype=input_dtype, precision=precision)


def _reference_forward(model, embeds1, embeds2, rels):
    """Pure-JAX reference of the PyTorch forward (f32, HIGHEST precision)."""
    act = embeds1.T
    for rel in rels:
        act = jnp.dot(act, model.mats[rel],
                      precision=jax.lax.Precision.HIGHEST)
    return jnp.sum(act.T * embeds2, axis=0)


if __name__ == "__main__":
    key = jax.random.PRNGKey(0)
    k_model, k_e1, k_e2, k_e1s, k_e2s = jax.random.split(key, 5)

    dims = {"protein": 32, "drug": 48, "function": 40}
    relations = {
        "protein": [("drug", "targets")],
        "drug": [("function", "affects")],
        "function": [],
    }
    # Metapath protein --targets--> drug --affects--> function.
    rels = [("protein", "targets", "drug"), ("drug", "affects", "function")]

    model = BilinearPathDecoderPallas(k_model, relations, dims)

    # --- Large-batch path: exercises the Pallas kernel (>= 2 grid tiles). ---
    B = 1024
    embeds1 = jax.random.normal(k_e1, (dims["protein"], B), dtype=jnp.float32)
    embeds2 = jax.random.normal(k_e2, (dims["function"], B), dtype=jnp.float32)
    ref = _reference_forward(model, embeds1, embeds2, rels)

    # (a) f32 validation mode (HIGHEST precision): near bit-match, only the
    #     metapath re-association differs (~1e-6 level).
    s_f32 = model.forward(embeds1, embeds2, rels,
                          input_dtype=jnp.float32,
                          precision=jax.lax.Precision.HIGHEST)
    s_f32 = jax.block_until_ready(s_f32)
    assert s_f32.shape == (B,)
    assert jnp.allclose(s_f32, ref, atol=2e-3, rtol=2e-4), (s_f32[:4], ref[:4])

    # (b) default production mode (bf16 streams, default MXU precision).
    s_bf16 = model.forward(embeds1, embeds2, rels)
    s_bf16 = jax.block_until_ready(s_bf16)
    assert s_bf16.shape == (B,)
    assert jnp.allclose(s_bf16, ref, atol=0.5, rtol=5e-2), (s_bf16[:4], ref[:4])

    # --- Small-batch bypass path (B < 256): pure-JAX, no lane padding. -------
    Bs = 8
    e1s = jax.random.normal(k_e1s, (dims["protein"], Bs), dtype=jnp.float32)
    e2s = jax.random.normal(k_e2s, (dims["function"], Bs), dtype=jnp.float32)
    s_small = jax.block_until_ready(model.forward(e1s, e2s, rels))
    ref_small = _reference_forward(model, e1s, e2s, rels)
    assert s_small.shape == (Bs,)
    assert jnp.allclose(s_small, ref_small, atol=1e-4, rtol=1e-4)

    # TODO(synk): margin-based training loss / negative sampling (host-side,
    # graph-dependent) is out of scope; only forward() is ported.
    print("KERNEL_OK")
</pallas_src>

<mosaic_0001>
module attributes {stable_mosaic.version = 11 : i64} {
  func.func @kernel(%arg0: i32, %arg1: memref<32x512xf32, #tpu.memory_space<vmem>>, %arg2: memref<40x512xf32, #tpu.memory_space<vmem>>, %arg3: memref<32x40xf32, #tpu.memory_space<vmem>>, %arg4: memref<1x512xf32, #tpu.memory_space<vmem>>) attributes {dimension_semantics = [#tpu.dimension_semantics<parallel>], iteration_bounds = array<i64: 2>, scalar_prefetch = 0 : i64, scratch_operands = 0 : i64, tpu.core_type = #tpu.core_type<tc>, window_params = [{transform_indices = @transform_0, window_bounds = array<i64: 32, 512>}, {transform_indices = @transform_1, window_bounds = array<i64: 40, 512>}, {pipeline_mode = #tpu.pipeline_mode<synchronous>, transform_indices = @transform_2, window_bounds = array<i64: 32, 40>}, {transform_indices = @transform_3, window_bounds = array<i64: 1, 512>}]} {
    %c0 = arith.constant 0 : index
    %c0_0 = arith.constant 0 : index
    %0 = vector.load %arg3[%c0, %c0_0] : memref<32x40xf32, #tpu.memory_space<vmem>>, vector<32x40xf32>
    %c0_1 = arith.constant 0 : index
    %c0_2 = arith.constant 0 : index
    %1 = vector.load %arg2[%c0_1, %c0_2] : memref<40x512xf32, #tpu.memory_space<vmem>>, vector<40x512xf32>
    %cst = arith.constant dense<0.000000e+00> : vector<32x512xf32>
    %2 = tpu.matmul %0, %1, %cst {dimension_numbers = #tpu.dot_dimension_numbers<[1], [0], [0], [1], [0, 0, 1, 1], [], []>, precision = #tpu.contract_precision<fp32>} : vector<32x40xf32>, vector<40x512xf32>, vector<32x512xf32> -> vector<32x512xf32>
    %c0_3 = arith.constant 0 : index
    %c0_4 = arith.constant 0 : index
    %3 = vector.load %arg1[%c0_3, %c0_4] : memref<32x512xf32, #tpu.memory_space<vmem>>, vector<32x512xf32>
    %4 = arith.mulf %3, %2 : vector<32x512xf32>
    %cst_5 = arith.constant dense<0.000000e+00> : vector<512xf32>
    %5 = vector.multi_reduction <add>, %4, %cst_5 [0] : vector<32x512xf32> to vector<512xf32>
    %6 = vector.shape_cast %5 : vector<512xf32> to vector<1x512xf32>
    %c0_6 = arith.constant 0 : index
    %c0_7 = arith.constant 0 : index
    %7 = vector.load %arg4[%c0_6, %c0_7] : memref<1x512xf32, #tpu.memory_space<vmem>>, vector<1x512xf32>
    tpu.vector_store %arg4[%c0_6, %c0_7], %6 {strides = array<i32>} : memref<1x512xf32, #tpu.memory_space<vmem>>, vector<1x512xf32>,
    return
  }
  func.func @transform_0(%arg0: i32) -> (i32, i32) {
    %c0_i32 = arith.constant 0 : i32
    %c0_i32_0 = arith.constant 0 : i32
    return %c0_i32, %arg0 : i32, i32
  }
  func.func @transform_1(%arg0: i32) -> (i32, i32) {
    %c0_i32 = arith.constant 0 : i32
    %c0_i32_0 = arith.constant 0 : i32
    return %c0_i32, %arg0 : i32, i32
  }
  func.func @transform_2(%arg0: i32) -> (i32, i32) {
    %c0_i32 = arith.constant 0 : i32
    %c0_i32_0 = arith.constant 0 : i32
    %c0_i32_1 = arith.constant 0 : i32
    return %c0_i32, %c0_i32_0 : i32, i32
  }
  func.func @transform_3(%arg0: i32) -> (i32, i32) {
    %c0_i32 = arith.constant 0 : i32
    %c0_i32_0 = arith.constant 0 : i32
    return %c0_i32, %arg0 : i32, i32
  }
}

</mosaic_0001>

<llo_original>
// kernel: tpu_custom_call.1
$region0: #{tpu_custom_call.1}
  #allocation0 [shape = 'u32[]', space=smem, size = 0x4, offset = 0x4, fixed_abs, tag = 'smem constant byte address 0x4 - core index']
  #allocation1 [shape = 'u32[144,128]{1,0:T(1,128)}', space=vmem, size = 0x12000, scoped, tag = 'internal scratch']
  %s0 = inlined_call_operand.hbm [shape: f32[32,1024], index: 0, kind: input, shape index: {}]
  %s1 = inlined_call_operand.hbm [shape: f32[40,1024], index: 1, kind: input, shape index: {}]
  %s2 = inlined_call_operand.hbm [shape: f32[32,40], index: 2, kind: input, shape index: {}]
  %s3 = inlined_call_operand.hbm [shape: f32[1,1024], index: 3, kind: output, shape index: {}]
  %s4 = sld [smem:[#allocation0]]
  $region57: #{tpu_custom_call.1} parent=0
    _
  %s6 = ssub.s32 1, %s4
  %s7 = scalar_select 0, %s6, %s4
  $region1: #{tpu_custom_call.1} parent=0
    #allocation2 [shape = 'u8[131072]{0}', space=vmem, size = 0x20000, scoped, tag = 'input window, operand 0']
    #allocation3 [shape = 's32[2]{0}', space=sflag, size = 0x8, scoped, tag = 'scoped memory for tpu_custom_call.1']
    #allocation4 [shape = 's32[2]{0}', space=sflag, size = 0x8, scoped, tag = 'scoped memory for tpu_custom_call.1']
    #allocation5 [shape = 'u8[163840]{0}', space=vmem, size = 0x28000, scoped, tag = 'input window, operand 1']
    #allocation6 [shape = 's32[2]{0}', space=sflag, size = 0x8, scoped, tag = 'scoped memory for tpu_custom_call.1']
    #allocation7 [shape = 'u8[16384]{0}', space=vmem, size = 0x4000, scoped, tag = 'input window, operand 2, single buffered']
    #allocation8 [shape = 'u8[4096]{0}', space=vmem, size = 0x1000, scoped, tag = 'output window, operand 0']
    %8 = vsyncpa [#allocation3], 0
    %s9 = scalar_lea.sflag [#allocation3], 1
    %10 = vsyncpa %s9, 0
    %11 = vsyncpa [#allocation6], 0
    %s12 = scalar_lea.sflag [#allocation6], 1
    %13 = vsyncpa %s12, 0
    %14 = vsyncpa [#allocation4], 0
    %s15 = scalar_lea.sflag [#allocation4], 1
    %16 = vsyncpa %s15, 0
    loop: start=0, step=1, limit=4
    $region2: #{tpu_custom_call.1} parent=1 // loop_pre_header
      _
    $region3: #{tpu_custom_call.1} parent=1 // loop_header
      %s18 = sphi 0, %s22
      %p19 = scmp.ge.s32.totalorder %s18, 4
      %s28 = sphi 0, %s30
      %s31 = sphi 0, %s28
      %s32 = sphi 0, %s31
      %s48 = sphi 0, %s32
      %s54 = sphi 0, %s56
      %s57 = sphi 0, %s54
      %s58 = sphi 0, %s57
      %s74 = sphi 0, %s58
      %s78 = sphi 0, %s78
      %s80 = sphi 0, %s78
      %s81 = sphi 0, %s80
      %s95 = sphi 0, %s81
      %s101 = sphi 0, %s103
      %s104 = sphi 0, %s101
      %s105 = sphi 0, %s104
      %s121 = sphi 0, %s105
    $region4: #{tpu_custom_call.1} parent=1 // loop_header_branch
      %21 = sbr.rel (%p19) target = $region8
    $region5: #{tpu_custom_call.1} parent=1 // loop_body
      %s23 = ssub.s32 %s18, 1
      %s24 = ssub.s32 %s18, 2
      %s25 = sadd.s32 %s18, 1
      %s26 = ssub.s32 %s18, %s25
      %p27 = scmp.eq.s32.totalorder %s26, 0
      %s29 = sadd.s32 %s28, 1
      %s30 = scalar_select %p27, %s28, %s29
      %p33 = pneg %p27
      %p34 = scmp.eq.s32.totalorder %s18, 1
      %p35 = por %p33, %p34
      %p36 = scmp.ne.s32.totalorder %s28, %s31
      %p37 = scmp.eq.s32.totalorder %s18, 0
      %p38 = por %p36, %p37
      %p39 = scmp.ne.s32.totalorder %s28, %s31
      %p40 = scmp.eq.s32.totalorder %s23, 1
      %p41 = por %p39, %p40
      %p42 = scmp.ne.s32.totalorder %s31, %s32
      %p43 = scmp.eq.s32.totalorder %s23, 0
      %p44 = por %p42, %p43
      %p45 = scmp.ne.s32.totalorder %s31, %s32
      %p46 = scmp.eq.s32.totalorder %s24, 1
      %p47 = por %p45, %p46
      %p49 = scmp.ne.s32.totalorder %s32, %s48
      %p50 = scmp.eq.s32.totalorder %s24, 0
      %p51 = por %p49, %p50
      %s52 = ssub.s32 %s18, %s25
      %p53 = scmp.eq.s32.totalorder %s52, 0
      %s55 = sadd.s32 %s54, 1
      %s56 = scalar_select %p53, %s54, %s55
      %p59 = pneg %p53
      %p60 = scmp.eq.s32.totalorder %s18, 1
      %p61 = por %p59, %p60
      %p62 = scmp.ne.s32.totalorder %s54, %s57
      %p63 = scmp.eq.s32.totalorder %s18, 0
      %p64 = por %p62, %p63
      %p65 = scmp.ne.s32.totalorder %s54, %s57
      %p66 = scmp.eq.s32.totalorder %s23, 1
      %p67 = por %p65, %p66
      %p68 = scmp.ne.s32.totalorder %s57, %s58
      %p69 = scmp.eq.s32.totalorder %s23, 0
      %p70 = por %p68, %p69
      %p71 = scmp.ne.s32.totalorder %s57, %s58
      %p72 = scmp.eq.s32.totalorder %s24, 1
      %p73 = por %p71, %p72
      %p75 = scmp.ne.s32.totalorder %s58, %s74
      %p76 = scmp.eq.s32.totalorder %s24, 0
      %p77 = por %p75, %p76
      %s79 = sadd.s32 %s78, 1
      %p82 = scmp.eq.s32.totalorder %s18, 1
      %p83 = scmp.ne.s32.totalorder %s78, %s80
      %p84 = scmp.eq.s32.totalorder %s18, 0
      %p85 = por %p83, %p84
      %p86 = scmp.ne.s32.totalorder %s78, %s80
      %p87 = scmp.eq.s32.totalorder %s23, 1
      %p88 = por %p86, %p87
      %p89 = scmp.ne.s32.totalorder %s80, %s81
      %p90 = scmp.eq.s32.totalorder %s23, 0
      %p91 = por %p89, %p90
      %p92 = scmp.ne.s32.totalorder %s80, %s81
      %p93 = scmp.eq.s32.totalorder %s24, 1
      %p94 = por %p92, %p93
      %p96 = scmp.ne.s32.totalorder %s81, %s95
      %p97 = scmp.eq.s32.totalorder %s24, 0
      %p98 = por %p96, %p97
      %s99 = ssub.s32 %s18, %s25
      %p100 = scmp.eq.s32.totalorder %s99, 0
      %s102 = sadd.s32 %s101, 1
      %s103 = scalar_select %p100, %s101, %s102
      %p106 = pneg %p100
      %p107 = scmp.eq.s32.totalorder %s18, 1
      %p108 = por %p106, %p107
      %p109 = scmp.ne.s32.totalorder %s101, %s104
      %p110 = scmp.eq.s32.totalorder %s18, 0
      %p111 = por %p109, %p110
      %p112 = scmp.ne.s32.totalorder %s101, %s104
      %p113 = scmp.eq.s32.totalorder %s23, 1
      %p114 = por %p112, %p113
      %p115 = scmp.ne.s32.totalorder %s104, %s105
      %p116 = scmp.eq.s32.totalorder %s23, 0
      %p117 = por %p115, %p116
      %p118 = scmp.ne.s32.totalorder %s104, %s105
      %p119 = scmp.eq.s32.totalorder %s24, 1
      %p120 = por %p118, %p119
      %p122 = scmp.ne.s32.totalorder %s105, %s121
      %p123 = scmp.eq.s32.totalorder %s24, 0
      %p124 = por %p122, %p123
      %p125 = scmp.le.s32.totalorder 1, %s18
      %p126 = scmp.lt.s32.totalorder %s18, 3
      %p127 = pnand %p125, %p126
      %p128 = pneg %p127
      // Predicated region
      $region9: #{tpu_custom_call.1} parent=5 // pred_check
        _
      $region10: #{tpu_custom_call.1} parent=5 // pred_check_branch
        %130 = sbr.rel (%p127) target = $region12
      $region11: #{tpu_custom_call.1} parent=5 // pred_region
        %s131 = ssub.s32 %s18, 1
        // Predicated region
        $region13: #{tpu_custom_call.1} parent=11 // pred_check
          %p132 = pneg %p91
        $region14: #{tpu_custom_call.1} parent=11 // pred_check_branch
          %134 = sbr.rel (%p132) target = $region16
        $region15: #{tpu_custom_call.1} parent=11 // pred_region
          %s136 = ssub.s32 512, 512
          %137 = vsyncadd [#allocation6], %s136
          %s138 = sshll.u32 [#allocation7], 4
          %s139 = int_to_ptr.vmem [resolvable:$true] %s138
          %144 = dma.hbm_to_vmem [thread:$0]  %s2, 512, %s139, [#allocation6], 128, 128, 8
        $region16: #{tpu_custom_call.1} parent=11 // pred_fallthru
          _
      $region12: #{tpu_custom_call.1} parent=5 // pred_fallthru
        _
      %p145 = scmp.lt.s32.totalorder %s18, 2
      // Predicated region
      $region17: #{tpu_custom_call.1} parent=5 // pred_check
        %p146 = pneg %p145
      $region18: #{tpu_custom_call.1} parent=5 // pred_check_branch
        %148 = sbr.rel (%p146) target = $region20
      $region19: #{tpu_custom_call.1} parent=5 // pred_region
        // Predicated region
        $region21: #{tpu_custom_call.1} parent=19 // pred_check
          %p149 = pneg %p38
        $region22: #{tpu_custom_call.1} parent=19 // pred_check_branch
          %151 = sbr.rel (%p149) target = $region24
        $region23: #{tpu_custom_call.1} parent=19 // pred_region
          %s152 = sand.u32 %s28, 1
          %s153 = scalar_lea.sflag [#allocation3], %s152
          %s154 = sand.u32 %s28, 1
          %s155 = smul.addr %s154, 128
          %s156 = scalar_lea.vmem [#allocation2], %s155
          %s157 = smul.u32 4, %s18
          %s159 = ssub.s32 2048, 2048
          %160 = vsyncadd %s153, %s159
          %s161 = smul.addr %s157, 128
          %s162 = scalar_lea.hbm %s0, %s161
          %s163 = sshll.u32 %s156, 4
          %s164 = int_to_ptr.vmem [resolvable:$true] %s163
          %169 = dma.hbm_to_vmem [thread:$0]  %s162, 2048, %s164, %s153, 1024, 512, 32
        $region24: #{tpu_custom_call.1} parent=19 // pred_fallthru
          _
        // Predicated region
        $region25: #{tpu_custom_call.1} parent=19 // pred_check
          %p170 = pneg %p64
        $region26: #{tpu_custom_call.1} parent=19 // pred_check_branch
          %172 = sbr.rel (%p170) target = $region28
        $region27: #{tpu_custom_call.1} parent=19 // pred_region
          %s173 = sand.u32 %s18, 1
          %s174 = scalar_lea.sflag [#allocation6], %s173
          %s175 = sand.u32 %s54, 1
          %s176 = smul.addr %s175, 160
          %s177 = scalar_lea.vmem [#allocation5], %s176
          %s178 = smul.u32 4, %s18
          %s180 = ssub.s32 2560, 2560
          %181 = vsyncadd %s174, %s180
          %s182 = smul.addr %s178, 128
          %s183 = scalar_lea.hbm %s1, %s182
          %s184 = sshll.u32 %s177, 4
          %s185 = int_to_ptr.vmem [resolvable:$true] %s184
          %190 = dma.hbm_to_vmem [thread:$0]  %s183, 2560, %s185, %s174, 1024, 512, 32
        $region28: #{tpu_custom_call.1} parent=19 // pred_fallthru
          _
      $region20: #{tpu_custom_call.1} parent=5 // pred_fallthru
        _
      %p191 = scmp.le.s32.totalorder 1, %s18
      %p192 = scmp.lt.s32.totalorder %s18, 3
      %p193 = pnand %p191, %p192
      %p194 = pneg %p193
      // Predicated region
      $region29: #{tpu_custom_call.1} parent=5 // pred_check
        _
      $region30: #{tpu_custom_call.1} parent=5 // pred_check_branch
        %196 = sbr.rel (%p193) target = $region32
      $region31: #{tpu_custom_call.1} parent=5 // pred_region
        %s197 = ssub.s32 %s18, 1
        %s198 = sand.u32 %s31, 1
        %s199 = scalar_lea.sflag [#allocation3], %s198
        %s200 = sand.u32 %s31, 1
        %s201 = smul.addr %s200, 128
        %s202 = scalar_lea.vmem [#allocation2], %s201
        // Predicated region
        $region33: #{tpu_custom_call.1} parent=31 // pred_check
          %p203 = pneg %p44
        $region34: #{tpu_custom_call.1} parent=31 // pred_check_branch
          %205 = sbr.rel (%p203) target = $region36
        $region35: #{tpu_custom_call.1} parent=31 // pred_region
          %206 = dma.done %s199, 2048
        $region36: #{tpu_custom_call.1} parent=31 // pred_fallthru
          _
        %s207 = sand.u32 %s23, 1
        %s208 = scalar_lea.sflag [#allocation6], %s207
        %s209 = sand.u32 %s57, 1
        %s210 = smul.addr %s209, 160
        %s211 = scalar_lea.vmem [#allocation5], %s210
        // Predicated region
        $region37: #{tpu_custom_call.1} parent=31 // pred_check
          %p212 = pneg %p70
        $region38: #{tpu_custom_call.1} parent=31 // pred_check_branch
          %214 = sbr.rel (%p212) target = $region40
        $region39: #{tpu_custom_call.1} parent=31 // pred_region
          %215 = dma.done %s208, 2560
        $region40: #{tpu_custom_call.1} parent=31 // pred_fallthru
          _
        // Predicated region
        $region41: #{tpu_custom_call.1} parent=31 // pred_check
          %p216 = pneg %p91
        $region42: #{tpu_custom_call.1} parent=31 // pred_check_branch
          %218 = sbr.rel (%p216) target = $region44
        $region43: #{tpu_custom_call.1} parent=31 // pred_region
          %219 = dma.done [#allocation6], 512
        $region44: #{tpu_custom_call.1} parent=31 // pred_fallthru
          _
        %s220 = sand.u32 %s31, 1
        %s221 = scalar_lea.sflag [#allocation3], %s220
        %s222 = sand.u32 %s31, 1
        %s223 = smul.addr %s222, 128
        %s224 = scalar_lea.vmem [#allocation2], %s223
        %p225 = pneg %p44
        %p226 = pneg %p41
        %s227 = sand.u32 %s23, 1
        %s228 = scalar_lea.sflag [#allocation6], %s227
        %s229 = sand.u32 %s57, 1
        %s230 = smul.addr %s229, 160
        %s231 = scalar_lea.vmem [#allocation5], %s230
        %p232 = pneg %p70
        %p233 = pneg %p67
        %p234 = pneg %p91
        %p235 = pneg %p88
        %p236 = pneg %p117
        %p237 = pneg %p114
        %s238 = sand.u32 %s104, 1
        %s239 = scalar_lea.sflag [#allocation4], %s238
        %s240 = sand.u32 %s104, 1
        %s241 = smul.addr %s240, 4
        %s242 = scalar_lea.vmem [#allocation8], %s241
        %s243 = smul.u32 4, %s23
        %s244 = smul.u32 4, %s23
        %s245 = smul.u32 4, %s23
        %v246 = vld [vmem:[#allocation7] sm:$0xff]
        %v247 = vld [vmem:[#allocation7 + $0x8] sm:$0xff]
        %v248 = vld [vmem:[#allocation7 + $0x10] sm:$0xff]
        %v249 = vld [vmem:[#allocation7 + $0x18] sm:$0xff]
        %v250 = vld [vmem:[%s211] sm:$0xff]
        %v251 = vld [vmem:[%s211 + $0x8] sm:$0xff]
        %v252 = vld [vmem:[%s211 + $0x10] sm:$0xff]
        %v253 = vld [vmem:[%s211 + $0x18] sm:$0xff]
        %v254 = vld [vmem:[%s211 + $0x20] sm:$0xff]
        %v255 = vld [vmem:[%s211 + $0x28] sm:$0xff]
        %v256 = vld [vmem:[%s211 + $0x30] sm:$0xff]
        %v257 = vld [vmem:[%s211 + $0x38] sm:$0xff]
        %v258 = vld [vmem:[%s211 + $0x40] sm:$0xff]
        %v259 = vld [vmem:[%s211 + $0x48] sm:$0xff]
        %v260 = vld [vmem:[%s211 + $0x50] sm:$0xff]
        %v261 = vld [vmem:[%s211 + $0x58] sm:$0xff]
        %v262 = vld [vmem:[%s211 + $0x60] sm:$0xff]
        %v263 = vld [vmem:[%s211 + $0x68] sm:$0xff]
        %v264 = vld [vmem:[%s211 + $0x70] sm:$0xff]
        %v265 = vld [vmem:[%s211 + $0x78] sm:$0xff]
        %v266 = vld [vmem:[%s211 + $0x80] sm:$0xff]
        %v267 = vld [vmem:[%s211 + $0x88] sm:$0xff]
        %v268 = vld [vmem:[%s211 + $0x90] sm:$0xff]
        %v269 = vld [vmem:[%s211 + $0x98] sm:$0xff]
        %vm270 = vcmask 326656
        %v272 = vsel %vm270, %v246, 0
        %v275 = vsel %vm270, %v247, 0
        %v278 = vsel %vm270, %v248, 0
        %v281 = vsel %vm270, %v249, 0
        %v283 = vand.u32 %v251, 4294901760
        %284 = vmatprep.subr.mxu0 %v283
        %v285 = vand.u32 %v250, 4294901760
        %286 = vmatpush1.msra.mxu0 %v285
        %v287 = vand.u32 %v255, 4294901760
        %288 = vmatprep.subr.mxu0 %v287
        %v289 = vand.u32 %v254, 4294901760
        %290 = vmatpush1.msra.mxu0 %v289
        %v291 = vand.u32 %v259, 4294901760
        %292 = vmatprep.subr.mxu0 %v291
        %v293 = vand.u32 %v258, 4294901760
        %294 = vmatpush1.msra.mxu0 %v293
        %v295 = vand.u32 %v263, 4294901760
        %296 = vmatprep.subr.mxu0 %v295
        %v297 = vand.u32 %v262, 4294901760
        %298 = vmatpush1.msra.mxu0 %v297
        %v299 = vand.u32 %v267, 4294901760
        %300 = vmatprep.subr.mxu0 %v299
        %v301 = vand.u32 %v266, 4294901760
        %302 = vmatpush1.msra.mxu0 %v301
        %303 = vmatprep.subr.mxu0 0.0
        %304 = vmatpush1.msra.mxu0 0.0
        %305 = vmatprep.subr.mxu0 0.0
        %306 = vmatpush1.msra.mxu0 0.0
        %307 = vmatprep.subr.mxu0 0.0
        %308 = vmatpush1.msra.mxu0 0.0
        %309 = vmatprep.subr.mxu0 0.0
        %310 = vmatpush1.msra.mxu0 0.0
        %311 = vmatprep.subr.mxu0 0.0
        %312 = vmatpush1.msra.mxu0 0.0
        %313 = vmatprep.subr.mxu0 0.0
        %314 = vmatpush1.msra.mxu0 0.0
        %315 = vmatprep.subr.mxu0 0.0
        %316 = vmatpush1.msra.mxu0 0.0
        %317 = vmatprep.subr.mxu0 0.0
        %318 = vmatpush1.msra.mxu0 0.0
        %319 = vmatprep.subr.mxu0 0.0
        %320 = vmatpush1.msra.mxu0 0.0
        %321 = vmatprep.subr.mxu0 0.0
        %322 = vmatpush1.msra.mxu0 0.0
        %323 = vmatprep.subr.mxu0 0.0
        %324 = vmatpush1.msra.mxu0 0.0
        %325 = vmatprep.subr.mxu0 0.0
        %326 = vmatpush1.msra.mxu0 0.0
        %327 = vmatprep.subr.mxu0 0.0
        %328 = vmatpush1.msra.mxu0 0.0
        %329 = vmatprep.subr.mxu0 0.0
        %330 = vmatpush1.msra.mxu0 0.0
        %331 = vmatprep.subr.mxu0 0.0
        %332 = vmatpush1.msra.mxu0 0.0
        %333 = vmatprep.subr.mxu0 0.0
        %334 = vmatpush1.msra.mxu0 0.0
        %335 = vmatprep.subr.mxu0 0.0
        %336 = vmatpush1.msra.mxu0 0.0
        %337 = vmatprep.subr.mxu0 0.0
        %338 = vmatpush1.msra.mxu0 0.0
        %339 = vmatprep.subr.mxu0 0.0
        %340 = vmatpush1.msra.mxu0 0.0
        %341 = vmatprep.subr.mxu0 0.0
        %342 = vmatpush1.msra.mxu0 0.0
        %343 = vmatprep.subr.mxu0 0.0
        %344 = vmatpush1.msra.mxu0 0.0
        %345 = vmatprep.subr.mxu0 0.0
        %346 = vmatpush1.msra.mxu0 0.0
        %347 = vmatprep.subr.mxu0 0.0
        %348 = vmatpush1.msra.mxu0 0.0
        %349 = vmatprep.subr.mxu0 0.0
        %350 = vmatpush1.msra.mxu0 0.0
        %351 = vmatprep.subr.mxu0 0.0
        %352 = vmatpush1.msra.mxu0 0.0
        %353 = vmatprep.subr.mxu0 0.0
        %354 = vmatpush1.msra.mxu0 0.0
        %355 = vmatprep.subr.mxu0 0.0
        %356 = vmatpush1.msra.mxu0 0.0
        %357 = vmatprep.mubr.f32.mxu0 0.0
        %v358 = vand.u32 %v272, 4294901760
        %v359 = vsub.f32 %v272, %v358
        %v360 = vand.u32 %v359, 4294901760
        %v361 = vsub.f32 %v359, %v360
        %v362 = vand.u32 %v361, 4294901760
        %363 = vmatmul.mubr.f32.gmra.mrb[0].mxu0 %v362
        %v364 = vpop.f32.mrb[0].mxu0
        %v365 = vadd.f32 0.0, %v364
        %v366 = vpop.f32.mrb[0].mxu0
        %v367 = vadd.f32 0.0, %v366
        %368 = vmatprep.mubr.f32.mxu0 0.0
        %v369 = vand.u32 %v275, 4294901760
        %v370 = vsub.f32 %v275, %v369
        %v371 = vand.u32 %v370, 4294901760
        %v372 = vsub.f32 %v370, %v371
        %v373 = vand.u32 %v372, 4294901760
        %374 = vmatmul.mubr.f32.gmra.mrb[0].mxu0 %v373
        %v375 = vpop.f32.mrb[0].mxu0
        %v376 = vadd.f32 0.0, %v375
        %v377 = vpop.f32.mrb[0].mxu0
        %v378 = vadd.f32 0.0, %v377
        %379 = vmatprep.mubr.f32.mxu0 0.0
        %v380 = vand.u32 %v278, 4294901760
        %v381 = vsub.f32 %v278, %v380
        %v382 = vand.u32 %v381, 4294901760
        %v383 = vsub.f32 %v381, %v382
        %v384 = vand.u32 %v383, 4294901760
        %385 = vmatmul.mubr.f32.gmra.mrb[0].mxu0 %v384
        %v386 = vpop.f32.mrb[0].mxu0
        %v387 = vadd.f32 0.0, %v386
        %v388 = vpop.f32.mrb[0].mxu0
        %v389 = vadd.f32 0.0, %v388
        %390 = vmatprep.mubr.f32.mxu0 0.0
        %v391 = vand.u32 %v281, 4294901760
        %v392 = vsub.f32 %v281, %v391
        %v393 = vand.u32 %v392, 4294901760
        %v394 = vsub.f32 %v392, %v393
        %v395 = vand.u32 %v394, 4294901760
        %396 = vmatmul.mubr.f32.gmra.mrb[0].mxu0 %v395
        %v397 = vpop.f32.mrb[0].mxu0
        %v398 = vadd.f32 0.0, %v397
        %v399 = vpop.f32.mrb[0].mxu0
        %v400 = vadd.f32 0.0, %v399
        %401 = vdwg.mxu0
        %v402 = vand.u32 %v251, 4294901760
        %v403 = vsub.f32 %v251, %v402
        %v404 = vand.u32 %v403, 4294901760
        %v405 = vsub.f32 %v403, %v404
        %v406 = vand.u32 %v405, 4294901760
        %407 = vmatprep.subr.mxu0 %v406
        %v408 = vand.u32 %v250, 4294901760
        %v409 = vsub.f32 %v250, %v408
        %v410 = vand.u32 %v409, 4294901760
        %v411 = vsub.f32 %v409, %v410
        %v412 = vand.u32 %v411, 4294901760
        %413 = vmatpush1.msra.mxu0 %v412
        %v414 = vand.u32 %v255, 4294901760
        %v415 = vsub.f32 %v255, %v414
        %v416 = vand.u32 %v415, 4294901760
        %v417 = vsub.f32 %v415, %v416
        %v418 = vand.u32 %v417, 4294901760
        %419 = vmatprep.subr.mxu0 %v418
        %v420 = vand.u32 %v254, 4294901760
        %v421 = vsub.f32 %v254, %v420
        %v422 = vand.u32 %v421, 4294901760
        %v423 = vsub.f32 %v421, %v422
        %v424 = vand.u32 %v423, 4294901760
        %425 = vmatpush1.msra.mxu0 %v424
        %v426 = vand.u32 %v259, 4294901760
        %v427 = vsub.f32 %v259, %v426
        %v428 = vand.u32 %v427, 4294901760
        %v429 = vsub.f32 %v427, %v428
        %v430 = vand.u32 %v429, 4294901760
        %431 = vmatprep.subr.mxu0 %v430
        %v432 = vand.u32 %v258, 4294901760
        %v433 = vsub.f32 %v258, %v432
        %v434 = vand.u32 %v433, 4294901760
        %v435 = vsub.f32 %v433, %v434
        %v436 = vand.u32 %v435, 4294901760
        %437 = vmatpush1.msra.mxu0 %v436
        %v438 = vand.u32 %v263, 4294901760
        %v439 = vsub.f32 %v263, %v438
        %v440 = vand.u32 %v439, 4294901760
        %v441 = vsub.f32 %v439, %v440
        %v442 = vand.u32 %v441, 4294901760
        %443 = vmatprep.subr.mxu0 %v442
        %v444 = vand.u32 %v262, 4294901760
        %v445 = vsub.f32 %v262, %v444
        %v446 = vand.u32 %v445, 4294901760
        %v447 = vsub.f32 %v445, %v446
        %v448 = vand.u32 %v447, 4294901760
        %449 = vmatpush1.msra.mxu0 %v448
        %v450 = vand.u32 %v267, 4294901760
        %v451 = vsub.f32 %v267, %v450
        %v452 = vand.u32 %v451, 4294901760
        %v453 = vsub.f32 %v451, %v452
        %v454 = vand.u32 %v453, 4294901760
        %455 = vmatprep.subr.mxu0 %v454
        %v456 = vand.u32 %v266, 4294901760
        %v457 = vsub.f32 %v266, %v456
        %v458 = vand.u32 %v457, 4294901760
        %v459 = vsub.f32 %v457, %v458
        %v460 = vand.u32 %v459, 4294901760
        %461 = vmatpush1.msra.mxu0 %v460
        %462 = vmatprep.subr.mxu0 0.0
        %463 = vmatpush1.msra.mxu0 0.0
        %464 = vmatprep.subr.mxu0 0.0
        %465 = vmatpush1.msra.mxu0 0.0
        %466 = vmatprep.subr.mxu0 0.0
        %467 = vmatpush1.msra.mxu0 0.0
        %468 = vmatprep.subr.mxu0 0.0
        %469 = vmatpush1.msra.mxu0 0.0
        %470 = vmatprep.subr.mxu0 0.0
        %471 = vmatpush1.msra.mxu0 0.0
        %472 = vmatprep.subr.mxu0 0.0
        %473 = vmatpush1.msra.mxu0 0.0
        %474 = vmatprep.subr.mxu0 0.0
        %475 = vmatpush1.msra.mxu0 0.0
        %476 = vmatprep.subr.mxu0 0.0
        %477 = vmatpush1.msra.mxu0 0.0
        %478 = vmatprep.subr.mxu0 0.0
        %479 = vmatpush1.msra.mxu0 0.0
        %480 = vmatprep.subr.mxu0 0.0
        %481 = vmatpush1.msra.mxu0 0.0
        %482 = vmatprep.subr.mxu0 0.0
        %483 = vmatpush1.msra.mxu0 0.0
        %484 = vmatprep.subr.mxu0 0.0
        %485 = vmatpush1.msra.mxu0 0.0
        %486 = vmatprep.subr.mxu0 0.0
        %487 = vmatpush1.msra.mxu0 0.0
        %488 = vmatprep.subr.mxu0 0.0
        %489 = vmatpush1.msra.mxu0 0.0
        %490 = vmatprep.subr.mxu0 0.0
        %491 = vmatpush1.msra.mxu0 0.0
        %492 = vmatprep.subr.mxu0 0.0
        %493 = vmatpush1.msra.mxu0 0.0
        %494 = vmatprep.subr.mxu0 0.0
        %495 = vmatpush1.msra.mxu0 0.0
        %496 = vmatprep.subr.mxu0 0.0
        %497 = vmatpush1.msra.mxu0 0.0
        %498 = vmatprep.subr.mxu0 0.0
        %499 = vmatpush1.msra.mxu0 0.0
        %500 = vmatprep.subr.mxu0 0.0
        %501 = vmatpush1.msra.mxu0 0.0
        %502 = vmatprep.subr.mxu0 0.0
        %503 = vmatpush1.msra.mxu0 0.0
        %504 = vmatprep.subr.mxu0 0.0
        %505 = vmatpush1.msra.mxu0 0.0
        %506 = vmatprep.subr.mxu0 0.0
        %507 = vmatpush1.msra.mxu0 0.0
        %508 = vmatprep.subr.mxu0 0.0
        %509 = vmatpush1.msra.mxu0 0.0
        %510 = vmatprep.subr.mxu0 0.0
        %511 = vmatpush1.msra.mxu0 0.0
        %512 = vmatprep.subr.mxu0 0.0
        %513 = vmatpush1.msra.mxu0 0.0
        %514 = vmatprep.subr.mxu0 0.0
        %515 = vmatpush1.msra.mxu0 0.0
        %516 = vmatprep.mubr.f32.mxu0 0.0
        %v517 = vand.u32 %v272, 4294901760
        %518 = vmatmul.mubr.f32.gmra.mrb[0].mxu0 %v517
        %v519 = vpop.f32.mrb[0].mxu0
        %v520 = vadd.f32 %v365, %v519
        %v521 = vpop.f32.mrb[0].mxu0
        %v522 = vadd.f32 %v367, %v521
        %523 = vmatprep.mubr.f32.mxu0 0.0
        %v524 = vand.u32 %v275, 4294901760
        %525 = vmatmul.mubr.f32.gmra.mrb[0].mxu0 %v524
        %v526 = vpop.f32.mrb[0].mxu0
        %v527 = vadd.f32 %v376, %v526
        %v528 = vpop.f32.mrb[0].mxu0
        %v529 = vadd.f32 %v378, %v528
        %530 = vmatprep.mubr.f32.mxu0 0.0
        %v531 = vand.u32 %v278, 4294901760
        %532 = vmatmul.mubr.f32.gmra.mrb[0].mxu0 %v531
        %v533 = vpop.f32.mrb[0].mxu0
        %v534 = vadd.f32 %v387, %v533
        %v535 = vpop.f32.mrb[0].mxu0
        %v536 = vadd.f32 %v389, %v535
        %537 = vmatprep.mubr.f32.mxu0 0.0
        %v538 = vand.u32 %v281, 4294901760
        %539 = vmatmul.mubr.f32.gmra.mrb[0].mxu0 %v538
        %v540 = vpop.f32.mrb[0].mxu0
        %v541 = vadd.f32 %v398, %v540
        %v542 = vpop.f32.mrb[0].mxu0
        %v543 = vadd.f32 %v400, %v542
        %544 = vdwg.mxu0
        %v545 = vand.u32 %v251, 4294901760
        %v546 = vsub.f32 %v251, %v545
        %547 = vmatprep.subr.mxu0 %v546
        %v548 = vand.u32 %v250, 4294901760
        %v549 = vsub.f32 %v250, %v548
        %550 = vmatpush1.msra.mxu0 %v549
        %v551 = vand.u32 %v255, 4294901760
        %v552 = vsub.f32 %v255, %v551
        %553 = vmatprep.subr.mxu0 %v552
        %v554 = vand.u32 %v254, 4294901760
        %v555 = vsub.f32 %v254, %v554
        %556 = vmatpush1.msra.mxu0 %v555
        %v557 = vand.u32 %v259, 4294901760
        %v558 = vsub.f32 %v259, %v557
        %559 = vmatprep.subr.mxu0 %v558
        %v560 = vand.u32 %v258, 4294901760
        %v561 = vsub.f32 %v258, %v560
        %562 = vmatpush1.msra.mxu0 %v561
        %v563 = vand.u32 %v263, 4294901760
        %v564 = vsub.f32 %v263, %v563
        %565 = vmatprep.subr.mxu0 %v564
        %v566 = vand.u32 %v262, 4294901760
        %v567 = vsub.f32 %v262, %v566
        %568 = vmatpush1.msra.mxu0 %v567
        %v569 = vand.u32 %v267, 4294901760
        %v570 = vsub.f32 %v267, %v569
        %571 = vmatprep.subr.mxu0 %v570
        %v572 = vand.u32 %v266, 4294901760
        %v573 = vsub.f32 %v266, %v572
        %574 = vmatpush1.msra.mxu0 %v573
        %575 = vmatprep.subr.mxu0 0.0
        %576 = vmatpush1.msra.mxu0 0.0
        %577 = vmatprep.subr.mxu0 0.0
        %578 = vmatpush1.msra.mxu0 0.0
        %579 = vmatprep.subr.mxu0 0.0
        %580 = vmatpush1.msra.mxu0 0.0
        %581 = vmatprep.subr.mxu0 0.0
        %582 = vmatpush1.msra.mxu0 0.0
        %583 = vmatprep.subr.mxu0 0.0
        %584 = vmatpush1.msra.mxu0 0.0
        %585 = vmatprep.subr.mxu0 0.0
        %586 = vmatpush1.msra.mxu0 0.0
        %587 = vmatprep.subr.mxu0 0.0
        %588 = vmatpush1.msra.mxu0 0.0
        %589 = vmatprep.subr.mxu0 0.0
        %590 = vmatpush1.msra.mxu0 0.0
        %591 = vmatprep.subr.mxu0 0.0
        %592 = vmatpush1.msra.mxu0 0.0
        %593 = vmatprep.subr.mxu0 0.0
        %594 = vmatpush1.msra.mxu0 0.0
        %595 = vmatprep.subr.mxu0 0.0
        %596 = vmatpush1.msra.mxu0 0.0
        %597 = vmatprep.subr.mxu0 0.0
        %598 = vmatpush1.msra.mxu0 0.0
        %599 = vmatprep.subr.mxu0 0.0
        %600 = vmatpush1.msra.mxu0 0.0
        %601 = vmatprep.subr.mxu0 0.0
        %602 = vmatpush1.msra.mxu0 0.0
        %603 = vmatprep.subr.mxu0 0.0
        %604 = vmatpush1.msra.mxu0 0.0
        %605 = vmatprep.subr.mxu0 0.0
        %606 = vmatpush1.msra.mxu0 0.0
        %607 = vmatprep.subr.mxu0 0.0
        %608 = vmatpush1.msra.mxu0 0.0
        %609 = vmatprep.subr.mxu0 0.0
        %610 = vmatpush1.msra.mxu0 0.0
        %611 = vmatprep.subr.mxu0 0.0
        %612 = vmatpush1.msra.mxu0 0.0
        %613 = vmatprep.subr.mxu0 0.0
        %614 = vmatpush1.msra.mxu0 0.0
        %615 = vmatprep.subr.mxu0 0.0
        %616 = vmatpush1.msra.mxu0 0.0
        %617 = vmatprep.subr.mxu0 0.0
        %618 = vmatpush1.msra.mxu0 0.0
        %619 = vmatprep.subr.mxu0 0.0
        %620 = vmatpush1.msra.mxu0 0.0
        %621 = vmatprep.subr.mxu0 0.0
        %622 = vmatpush1.msra.mxu0 0.0
        %623 = vmatprep.subr.mxu0 0.0
        %624 = vmatpush1.msra.mxu0 0.0
        %625 = vmatprep.subr.mxu0 0.0
        %626 = vmatpush1.msra.mxu0 0.0
        %627 = vmatprep.subr.mxu0 0.0
        %628 = vmatpush1.msra.mxu0 0.0
        %629 = vmatprep.mubr.f32.mxu0 0.0
        %v630 = vand.u32 %v272, 4294901760
        %v631 = vsub.f32 %v272, %v630
        %632 = vmatmul.mubr.f32.gmra.mrb[0].mxu0 %v631
        %v633 = vpop.f32.mrb[0].mxu0
        %v634 = vadd.f32 %v520, %v633
        %v635 = vpop.f32.mrb[0].mxu0
        %v636 = vadd.f32 %v522, %v635
        %637 = vmatprep.mubr.f32.mxu0 0.0
        %v638 = vand.u32 %v275, 4294901760
        %v639 = vsub.f32 %v275, %v638
        %640 = vmatmul.mubr.f32.gmra.mrb[0].mxu0 %v639
        %v641 = vpop.f32.mrb[0].mxu0
        %v642 = vadd.f32 %v527, %v641
        %v643 = vpop.f32.mrb[0].mxu0
        %v644 = vadd.f32 %v529, %v643
        %645 = vmatprep.mubr.f32.mxu0 0.0
        %v646 = vand.u32 %v278, 4294901760
        %v647 = vsub.f32 %v278, %v646
        %648 = vmatmul.mubr.f32.gmra.mrb[0].mxu0 %v647
        %v649 = vpop.f32.mrb[0].mxu0
        %v650 = vadd.f32 %v534, %v649
        %v651 = vpop.f32.mrb[0].mxu0
        %v652 = vadd.f32 %v536, %v651
        %653 = vmatprep.mubr.f32.mxu0 0.0
        %v654 = vand.u32 %v281, 4294901760
        %v655 = vsub.f32 %v281, %v654
        %656 = vmatmul.mubr.f32.gmra.mrb[0].mxu0 %v655
        %v657 = vpop.f32.mrb[0].mxu0
        %v658 = vadd.f32 %v541, %v657
        %v659 = vpop.f32.mrb[0].mxu0
        %v660 = vadd.f32 %v543, %v659
        %661 = vdwg.mxu0
        %v662 = vand.u32 %v251, 4294901760
        %663 = vmatprep.subr.mxu0 %v662
        %v664 = vand.u32 %v250, 4294901760
        %665 = vmatpush1.msra.mxu0 %v664
        %v666 = vand.u32 %v255, 4294901760
        %667 = vmatprep.subr.mxu0 %v666
        %v668 = vand.u32 %v254, 4294901760
        %669 = vmatpush1.msra.mxu0 %v668
        %v670 = vand.u32 %v259, 4294901760
        %671 = vmatprep.subr.mxu0 %v670
        %v672 = vand.u32 %v258, 4294901760
        %673 = vmatpush1.msra.mxu0 %v672
        %v674 = vand.u32 %v263, 4294901760
        %675 = vmatprep.subr.mxu0 %v674
        %v676 = vand.u32 %v262, 4294901760
        %677 = vmatpush1.msra.mxu0 %v676
        %v678 = vand.u32 %v267, 4294901760
        %679 = vmatprep.subr.mxu0 %v678
        %v680 = vand.u32 %v266, 4294901760
        %681 = vmatpush1.msra.mxu0 %v680
        %682 = vmatprep.subr.mxu0 0.0
        %683 = vmatpush1.msra.mxu0 0.0
        %684 = vmatprep.subr.mxu0 0.0
        %685 = vmatpush1.msra.mxu0 0.0
        %686 = vmatprep.subr.mxu0 0.0
        %687 = vmatpush1.msra.mxu0 0.0
        %688 = vmatprep.subr.mxu0 0.0
        %689 = vmatpush1.msra.mxu0 0.0
        %690 = vmatprep.subr.mxu0 0.0
        %691 = vmatpush1.msra.mxu0 0.0
        %692 = vmatprep.subr.mxu0 0.0
        %693 = vmatpush1.msra.mxu0 0.0
        %694 = vmatprep.subr.mxu0 0.0
        %695 = vmatpush1.msra.mxu0 0.0
        %696 = vmatprep.subr.mxu0 0.0
        %697 = vmatpush1.msra.mxu0 0.0
        %698 = vmatprep.subr.mxu0 0.0
        %699 = vmatpush1.msra.mxu0 0.0
        %700 = vmatprep.subr.mxu0 0.0
        %701 = vmatpush1.msra.mxu0 0.0
        %702 = vmatprep.subr.mxu0 0.0
        %703 = vmatpush1.msra.mxu0 0.0
        %704 = vmatprep.subr.mxu0 0.0
        %705 = vmatpush1.msra.mxu0 0.0
        %706 = vmatprep.subr.mxu0 0.0
        %707 = vmatpush1.msra.mxu0 0.0
        %708 = vmatprep.subr.mxu0 0.0
        %709 = vmatpush1.msra.mxu0 0.0
        %710 = vmatprep.subr.mxu0 0.0
        %711 = vmatpush1.msra.mxu0 0.0
        %712 = vmatprep.subr.mxu0 0.0
        %713 = vmatpush1.msra.mxu0 0.0
        %714 = vmatprep.subr.mxu0 0.0
        %715 = vmatpush1.msra.mxu0 0.0
        %716 = vmatprep.subr.mxu0 0.0
        %717 = vmatpush1.msra.mxu0 0.0
        %718 = vmatprep.subr.mxu0 0.0
        %719 = vmatpush1.msra.mxu0 0.0
        %720 = vmatprep.subr.mxu0 0.0
        %721 = vmatpush1.msra.mxu0 0.0
        %722 = vmatprep.subr.mxu0 0.0
        %723 = vmatpush1.msra.mxu0 0.0
        %724 = vmatprep.subr.mxu0 0.0
        %725 = vmatpush1.msra.mxu0 0.0
        %726 = vmatprep.subr.mxu0 0.0
        %727 = vmatpush1.msra.mxu0 0.0
        %728 = vmatprep.subr.mxu0 0.0
        %729 = vmatpush1.msra.mxu0 0.0
        %730 = vmatprep.subr.mxu0 0.0
        %731 = vmatpush1.msra.mxu0 0.0
        %732 = vmatprep.subr.mxu0 0.0
        %733 = vmatpush1.msra.mxu0 0.0
        %734 = vmatprep.subr.mxu0 0.0
        %735 = vmatpush1.msra.mxu0 0.0
        %736 = vmatprep.mubr.f32.mxu0 0.0
        %v737 = vand.u32 %v272, 4294901760
        %v738 = vsub.f32 %v272, %v737
        %v739 = vand.u32 %v738, 4294901760
        %740 = vmatmul.mubr.f32.gmra.mrb[0].mxu0 %v739
        %v741 = vpop.f32.mrb[0].mxu0
        %v742 = vadd.f32 %v634, %v741
        %v743 = vpop.f32.mrb[0].mxu0
        %v744 = vadd.f32 %v636, %v743
        %745 = vmatprep.mubr.f32.mxu0 0.0
        %v746 = vand.u32 %v275, 4294901760
        %v747 = vsub.f32 %v275, %v746
        %v748 = vand.u32 %v747, 4294901760
        %749 = vmatmul.mubr.f32.gmra.mrb[0].mxu0 %v748
        %v750 = vpop.f32.mrb[0].mxu0
        %v751 = vadd.f32 %v642, %v750
        %v752 = vpop.f32.mrb[0].mxu0
        %v753 = vadd.f32 %v644, %v752
        %754 = vmatprep.mubr.f32.mxu0 0.0
        %v755 = vand.u32 %v278, 4294901760
        %v756 = vsub.f32 %v278, %v755
        %v757 = vand.u32 %v756, 4294901760
        %758 = vmatmul.mubr.f32.gmra.mrb[0].mxu0 %v757
        %v759 = vpop.f32.mrb[0].mxu0
        %v760 = vadd.f32 %v650, %v759
        %v761 = vpop.f32.mrb[0].mxu0
        %v762 = vadd.f32 %v652, %v761
        %763 = vmatprep.mubr.f32.mxu0 0.0
        %v764 = vand.u32 %v281, 4294901760
        %v765 = vsub.f32 %v281, %v764
        %v766 = vand.u32 %v765, 4294901760
        %767 = vmatmul.mubr.f32.gmra.mrb[0].mxu0 %v766
        %v768 = vpop.f32.mrb[0].mxu0
        %v769 = vadd.f32 %v658, %v768
        %v770 = vpop.f32.mrb[0].mxu0
        %v771 = vadd.f32 %v660, %v770
        %772 = vdwg.mxu0
        %v773 = vand.u32 %v251, 4294901760
        %v774 = vsub.f32 %v251, %v773
        %v775 = vand.u32 %v774, 4294901760
        %776 = vmatprep.subr.mxu0 %v775
        %v777 = vand.u32 %v250, 4294901760
        %v778 = vsub.f32 %v250, %v777
        %v779 = vand.u32 %v778, 4294901760
        %780 = vmatpush1.msra.mxu0 %v779
        %v781 = vand.u32 %v255, 4294901760
        %v782 = vsub.f32 %v255, %v781
        %v783 = vand.u32 %v782, 4294901760
        %784 = vmatprep.subr.mxu0 %v783
        %v785 = vand.u32 %v254, 4294901760
        %v786 = vsub.f32 %v254, %v785
        %v787 = vand.u32 %v786, 4294901760
        %788 = vmatpush1.msra.mxu0 %v787
        %v789 = vand.u32 %v259, 4294901760
        %v790 = vsub.f32 %v259, %v789
        %v791 = vand.u32 %v790, 4294901760
        %792 = vmatprep.subr.mxu0 %v791
        %v793 = vand.u32 %v258, 4294901760
        %v794 = vsub.f32 %v258, %v793
        %v795 = vand.u32 %v794, 4294901760
        %796 = vmatpush1.msra.mxu0 %v795
        %v797 = vand.u32 %v263, 4294901760
        %v798 = vsub.f32 %v263, %v797
        %v799 = vand.u32 %v798, 4294901760
        %800 = vmatprep.subr.mxu0 %v799
        %v801 = vand.u32 %v262, 4294901760
        %v802 = vsub.f32 %v262, %v801
        %v803 = vand.u32 %v802, 4294901760
        %804 = vmatpush1.msra.mxu0 %v803
        %v805 = vand.u32 %v267, 4294901760
        %v806 = vsub.f32 %v267, %v805
        %v807 = vand.u32 %v806, 4294901760
        %808 = vmatprep.subr.mxu0 %v807
        %v809 = vand.u32 %v266, 4294901760
        %v810 = vsub.f32 %v266, %v809
        %v811 = vand.u32 %v810, 4294901760
        %812 = vmatpush1.msra.mxu0 %v811
        %813 = vmatprep.subr.mxu0 0.0
        %814 = vmatpush1.msra.mxu0 0.0
        %815 = vmatprep.subr.mxu0 0.0
        %816 = vmatpush1.msra.mxu0 0.0
        %817 = vmatprep.subr.mxu0 0.0
        %818 = vmatpush1.msra.mxu0 0.0
        %819 = vmatprep.subr.mxu0 0.0
        %820 = vmatpush1.msra.mxu0 0.0
        %821 = vmatprep.subr.mxu0 0.0
        %822 = vmatpush1.msra.mxu0 0.0
        %823 = vmatprep.subr.mxu0 0.0
        %824 = vmatpush1.msra.mxu0 0.0
        %825 = vmatprep.subr.mxu0 0.0
        %826 = vmatpush1.msra.mxu0 0.0
        %827 = vmatprep.subr.mxu0 0.0
        %828 = vmatpush1.msra.mxu0 0.0
        %829 = vmatprep.subr.mxu0 0.0
        %830 = vmatpush1.msra.mxu0 0.0
        %831 = vmatprep.subr.mxu0 0.0
        %832 = vmatpush1.msra.mxu0 0.0
        %833 = vmatprep.subr.mxu0 0.0
        %834 = vmatpush1.msra.mxu0 0.0
        %835 = vmatprep.subr.mxu0 0.0
        %836 = vmatpush1.msra.mxu0 0.0
        %837 = vmatprep.subr.mxu0 0.0
        %838 = vmatpush1.msra.mxu0 0.0
        %839 = vmatprep.subr.mxu0 0.0
        %840 = vmatpush1.msra.mxu0 0.0
        %841 = vmatprep.subr.mxu0 0.0
        %842 = vmatpush1.msra.mxu0 0.0
        %843 = vmatprep.subr.mxu0 0.0
        %844 = vmatpush1.msra.mxu0 0.0
        %845 = vmatprep.subr.mxu0 0.0
        %846 = vmatpush1.msra.mxu0 0.0
        %847 = vmatprep.subr.mxu0 0.0
        %848 = vmatpush1.msra.mxu0 0.0
        %849 = vmatprep.subr.mxu0 0.0
        %850 = vmatpush1.msra.mxu0 0.0
        %851 = vmatprep.subr.mxu0 0.0
        %852 = vmatpush1.msra.mxu0 0.0
        %853 = vmatprep.subr.mxu0 0.0
        %854 = vmatpush1.msra.mxu0 0.0
        %855 = vmatprep.subr.mxu0 0.0
        %856 = vmatpush1.msra.mxu0 0.0
        %857 = vmatprep.subr.mxu0 0.0
        %858 = vmatpush1.msra.mxu0 0.0
        %859 = vmatprep.subr.mxu0 0.0
        %860 = vmatpush1.msra.mxu0 0.0
        %861 = vmatprep.subr.mxu0 0.0
        %862 = vmatpush1.msra.mxu0 0.0
        %863 = vmatprep.subr.mxu0 0.0
        %864 = vmatpush1.msra.mxu0 0.0
        %865 = vmatprep.subr.mxu0 0.0
        %866 = vmatpush1.msra.mxu0 0.0
        %867 = vmatprep.mubr.f32.mxu0 0.0
        %v868 = vand.u32 %v272, 4294901760
        %869 = vmatmul.mubr.f32.gmra.mrb[0].mxu0 %v868
        %v870 = vpop.f32.mrb[0].mxu0
        %v871 = vadd.f32 %v742, %v870
        %v872 = vpop.f32.mrb[0].mxu0
        %v873 = vadd.f32 %v744, %v872
        %874 = vmatprep.mubr.f32.mxu0 0.0
        %v875 = vand.u32 %v275, 4294901760
        %876 = vmatmul.mubr.f32.gmra.mrb[0].mxu0 %v875
        %v877 = vpop.f32.mrb[0].mxu0
        %v878 = vadd.f32 %v751, %v877
        %v879 = vpop.f32.mrb[0].mxu0
        %v880 = vadd.f32 %v753, %v879
        %881 = vmatprep.mubr.f32.mxu0 0.0
        %v882 = vand.u32 %v278, 4294901760
        %883 = vmatmul.mubr.f32.gmra.mrb[0].mxu0 %v882
        %v884 = vpop.f32.mrb[0].mxu0
        %v885 = vadd.f32 %v760, %v884
        %v886 = vpop.f32.mrb[0].mxu0
        %v887 = vadd.f32 %v762, %v886
        %888 = vmatprep.mubr.f32.mxu0 0.0
        %v889 = vand.u32 %v281, 4294901760
        %890 = vmatmul.mubr.f32.gmra.mrb[0].mxu0 %v889
        %v891 = vpop.f32.mrb[0].mxu0
        %v892 = vadd.f32 %v769, %v891
        %v893 = vpop.f32.mrb[0].mxu0
        %v894 = vadd.f32 %v771, %v893
        %895 = vdwg.mxu0
        %v896 = vand.u32 %v251, 4294901760
        %897 = vmatprep.subr.mxu0 %v896
        %v898 = vand.u32 %v250, 4294901760
        %899 = vmatpush1.msra.mxu0 %v898
        %v900 = vand.u32 %v255, 4294901760
        %901 = vmatprep.subr.mxu0 %v900
        %v902 = vand.u32 %v254, 4294901760
        %903 = vmatpush1.msra.mxu0 %v902
        %v904 = vand.u32 %v259, 4294901760
        %905 = vmatprep.subr.mxu0 %v904
        %v906 = vand.u32 %v258, 4294901760
        %907 = vmatpush1.msra.mxu0 %v906
        %v908 = vand.u32 %v263, 4294901760
        %909 = vmatprep.subr.mxu0 %v908
        %v910 = vand.u32 %v262, 4294901760
        %911 = vmatpush1.msra.mxu0 %v910
        %v912 = vand.u32 %v267, 4294901760
        %913 = vmatprep.subr.mxu0 %v912
        %v914 = vand.u32 %v266, 4294901760
        %915 = vmatpush1.msra.mxu0 %v914
        %916 = vmatprep.subr.mxu0 0.0
        %917 = vmatpush1.msra.mxu0 0.0
        %918 = vmatprep.subr.mxu0 0.0
        %919 = vmatpush1.msra.mxu0 0.0
        %920 = vmatprep.subr.mxu0 0.0
        %921 = vmatpush1.msra.mxu0 0.0
        %922 = vmatprep.subr.mxu0 0.0
        %923 = vmatpush1.msra.mxu0 0.0
        %924 = vmatprep.subr.mxu0 0.0
        %925 = vmatpush1.msra.mxu0 0.0
        %926 = vmatprep.subr.mxu0 0.0
        %927 = vmatpush1.msra.mxu0 0.0
        %928 = vmatprep.subr.mxu0 0.0
        %929 = vmatpush1.msra.mxu0 0.0
        %930 = vmatprep.subr.mxu0 0.0
        %931 = vmatpush1.msra.mxu0 0.0
        %932 = vmatprep.subr.mxu0 0.0
        %933 = vmatpush1.msra.mxu0 0.0
        %934 = vmatprep.subr.mxu0 0.0
        %935 = vmatpush1.msra.mxu0 0.0
        %936 = vmatprep.subr.mxu0 0.0
        %937 = vmatpush1.msra.mxu0 0.0
        %938 = vmatprep.subr.mxu0 0.0
        %939 = vmatpush1.msra.mxu0 0.0
        %940 = vmatprep.subr.mxu0 0.0
        %941 = vmatpush1.msra.mxu0 0.0
        %942 = vmatprep.subr.mxu0 0.0
        %943 = vmatpush1.msra.mxu0 0.0
        %944 = vmatprep.subr.mxu0 0.0
        %945 = vmatpush1.msra.mxu0 0.0
        %946 = vmatprep.subr.mxu0 0.0
        %947 = vmatpush1.msra.mxu0 0.0
        %948 = vmatprep.subr.mxu0 0.0
        %949 = vmatpush1.msra.mxu0 0.0
        %950 = vmatprep.subr.mxu0 0.0
        %951 = vmatpush1.msra.mxu0 0.0
        %952 = vmatprep.subr.mxu0 0.0
        %953 = vmatpush1.msra.mxu0 0.0
        %954 = vmatprep.subr.mxu0 0.0
        %955 = vmatpush1.msra.mxu0 0.0
        %956 = vmatprep.subr.mxu0 0.0
        %957 = vmatpush1.msra.mxu0 0.0
        %958 = vmatprep.subr.mxu0 0.0
        %959 = vmatpush1.msra.mxu0 0.0
        %960 = vmatprep.subr.mxu0 0.0
        %961 = vmatpush1.msra.mxu0 0.0
        %962 = vmatprep.subr.mxu0 0.0
        %963 = vmatpush1.msra.mxu0 0.0
        %964 = vmatprep.subr.mxu0 0.0
        %965 = vmatpush1.msra.mxu0 0.0
        %966 = vmatprep.subr.mxu0 0.0
        %967 = vmatpush1.msra.mxu0 0.0
        %968 = vmatprep.subr.mxu0 0.0
        %969 = vmatpush1.msra.mxu0 0.0
        %970 = vmatprep.mubr.f32.mxu0 0.0
        %v971 = vand.u32 %v272, 4294901760
        %972 = vmatmul.mubr.f32.gmra.mrb[0].mxu0 %v971
        %v973 = vpop.f32.mrb[0].mxu0
        %v974 = vadd.f32 %v871, %v973
        %v975 = vpop.f32.mrb[0].mxu0
        %v976 = vadd.f32 %v873, %v975
        %977 = vmatprep.mubr.f32.mxu0 0.0
        %v978 = vand.u32 %v275, 4294901760
        %979 = vmatmul.mubr.f32.gmra.mrb[0].mxu0 %v978
        %v980 = vpop.f32.mrb[0].mxu0
        %v981 = vadd.f32 %v878, %v980
        %v982 = vpop.f32.mrb[0].mxu0
        %v983 = vadd.f32 %v880, %v982
        %984 = vmatprep.mubr.f32.mxu0 0.0
        %v985 = vand.u32 %v278, 4294901760
        %986 = vmatmul.mubr.f32.gmra.mrb[0].mxu0 %v985
        %v987 = vpop.f32.mrb[0].mxu0
        %v988 = vadd.f32 %v885, %v987
        %v989 = vpop.f32.mrb[0].mxu0
        %v990 = vadd.f32 %v887, %v989
        %991 = vmatprep.mubr.f32.mxu0 0.0
        %v992 = vand.u32 %v281, 4294901760
        %993 = vmatmul.mubr.f32.gmra.mrb[0].mxu0 %v992
        %v994 = vpop.f32.mrb[0].mxu0
        %v995 = vadd.f32 %v892, %v994
        %v996 = vpop.f32.mrb[0].mxu0
        %v997 = vadd.f32 %v894, %v996
        %998 = vdwg.mxu0
        %v999 = vand.u32 %v253, 4294901760
        %1000 = vmatprep.subr.mxu0 %v999
        %v1001 = vand.u32 %v252, 4294901760
        %1002 = vmatpush1.msra.mxu0 %v1001
        %v1003 = vand.u32 %v257, 4294901760
        %1004 = vmatprep.subr.mxu0 %v1003
        %v1005 = vand.u32 %v256, 4294901760
        %1006 = vmatpush1.msra.mxu0 %v1005
        %v1007 = vand.u32 %v261, 4294901760
        %1008 = vmatprep.subr.mxu0 %v1007
        %v1009 = vand.u32 %v260, 4294901760
        %1010 = vmatpush1.msra.mxu0 %v1009
        %v1011 = vand.u32 %v265, 4294901760
        %1012 = vmatprep.subr.mxu0 %v1011
        %v1013 = vand.u32 %v264, 4294901760
        %1014 = vmatpush1.msra.mxu0 %v1013
        %v1015 = vand.u32 %v269, 4294901760
        %1016 = vmatprep.subr.mxu0 %v1015
        %v1017 = vand.u32 %v268, 4294901760
        %1018 = vmatpush1.msra.mxu0 %v1017
        %1019 = vmatprep.subr.mxu0 0.0
        %1020 = vmatpush1.msra.mxu0 0.0
        %1021 = vmatprep.subr.mxu0 0.0
        %1022 = vmatpush1.msra.mxu0 0.0
        %1023 = vmatprep.subr.mxu0 0.0
        %1024 = vmatpush1.msra.mxu0 0.0
        %1025 = vmatprep.subr.mxu0 0.0
        %1026 = vmatpush1.msra.mxu0 0.0
        %1027 = vmatprep.subr.mxu0 0.0
        %1028 = vmatpush1.msra.mxu0 0.0
        %1029 = vmatprep.subr.mxu0 0.0
        %1030 = vmatpush1.msra.mxu0 0.0
        %1031 = vmatprep.subr.mxu0 0.0
        %1032 = vmatpush1.msra.mxu0 0.0
        %1033 = vmatprep.subr.mxu0 0.0
        %1034 = vmatpush1.msra.mxu0 0.0
        %1035 = vmatprep.subr.mxu0 0.0
        %1036 = vmatpush1.msra.mxu0 0.0
        %1037 = vmatprep.subr.mxu0 0.0
        %1038 = vmatpush1.msra.mxu0 0.0
        %1039 = vmatprep.subr.mxu0 0.0
        %1040 = vmatpush1.msra.mxu0 0.0
        %1041 = vmatprep.subr.mxu0 0.0
        %1042 = vmatpush1.msra.mxu0 0.0
        %1043 = vmatprep.subr.mxu0 0.0
        %1044 = vmatpush1.msra.mxu0 0.0
        %1045 = vmatprep.subr.mxu0 0.0
        %1046 = vmatpush1.msra.mxu0 0.0
        %1047 = vmatprep.subr.mxu0 0.0
        %1048 = vmatpush1.msra.mxu0 0.0
        %1049 = vmatprep.subr.mxu0 0.0
        %1050 = vmatpush1.msra.mxu0 0.0
        %1051 = vmatprep.subr.mxu0 0.0
        %1052 = vmatpush1.msra.mxu0 0.0
        %1053 = vmatprep.subr.mxu0 0.0
        %1054 = vmatpush1.msra.mxu0 0.0
        %1055 = vmatprep.subr.mxu0 0.0
        %1056 = vmatpush1.msra.mxu0 0.0
        %1057 = vmatprep.subr.mxu0 0.0
        %1058 = vmatpush1.msra.mxu0 0.0
        %1059 = vmatprep.subr.mxu0 0.0
        %1060 = vmatpush1.msra.mxu0 0.0
        %1061 = vmatprep.subr.mxu0 0.0
        %1062 = vmatpush1.msra.mxu0 0.0
        %1063 = vmatprep.subr.mxu0 0.0
        %1064 = vmatpush1.msra.mxu0 0.0
        %1065 = vmatprep.subr.mxu0 0.0
        %1066 = vmatpush1.msra.mxu0 0.0
        %1067 = vmatprep.subr.mxu0 0.0
        %1068 = vmatpush1.msra.mxu0 0.0
        %1069 = vmatprep.subr.mxu0 0.0
        %1070 = vmatpush1.msra.mxu0 0.0
        %1071 = vmatprep.subr.mxu0 0.0
        %1072 = vmatpush1.msra.mxu0 0.0
        %1073 = vmatprep.mubr.f32.mxu0 0.0
        %v1074 = vand.u32 %v272, 4294901760
        %v1075 = vsub.f32 %v272, %v1074
        %v1076 = vand.u32 %v1075, 4294901760
        %v1077 = vsub.f32 %v1075, %v1076
        %v1078 = vand.u32 %v1077, 4294901760
        %1079 = vmatmul.mubr.f32.gmra.mrb[0].mxu0 %v1078
        %v1080 = vpop.f32.mrb[0].mxu0
        %v1081 = vadd.f32 0.0, %v1080
        %v1082 = vpop.f32.mrb[0].mxu0
        %v1083 = vadd.f32 0.0, %v1082
        %1084 = vmatprep.mubr.f32.mxu0 0.0
        %v1085 = vand.u32 %v275, 4294901760
        %v1086 = vsub.f32 %v275, %v1085
        %v1087 = vand.u32 %v1086, 4294901760
        %v1088 = vsub.f32 %v1086, %v1087
        %v1089 = vand.u32 %v1088, 4294901760
        %1090 = vmatmul.mubr.f32.gmra.mrb[0].mxu0 %v1089
        %v1091 = vpop.f32.mrb[0].mxu0
        %v1092 = vadd.f32 0.0, %v1091
        %v1093 = vpop.f32.mrb[0].mxu0
        %v1094 = vadd.f32 0.0, %v1093
        %1095 = vmatprep.mubr.f32.mxu0 0.0
        %v1096 = vand.u32 %v278, 4294901760
        %v1097 = vsub.f32 %v278, %v1096
        %v1098 = vand.u32 %v1097, 4294901760
        %v1099 = vsub.f32 %v1097, %v1098
        %v1100 = vand.u32 %v1099, 4294901760
        %1101 = vmatmul.mubr.f32.gmra.mrb[0].mxu0 %v1100
        %v1102 = vpop.f32.mrb[0].mxu0
        %v1103 = vadd.f32 0.0, %v1102
        %v1104 = vpop.f32.mrb[0].mxu0
        %v1105 = vadd.f32 0.0, %v1104
        %1106 = vmatprep.mubr.f32.mxu0 0.0
        %v1107 = vand.u32 %v281, 4294901760
        %v1108 = vsub.f32 %v281, %v1107
        %v1109 = vand.u32 %v1108, 4294901760
        %v1110 = vsub.f32 %v1108, %v1109
        %v1111 = vand.u32 %v1110, 4294901760
        %1112 = vmatmul.mubr.f32.gmra.mrb[0].mxu0 %v1111
        %v1113 = vpop.f32.mrb[0].mxu0
        %v1114 = vadd.f32 0.0, %v1113
        %v1115 = vpop.f32.mrb[0].mxu0
        %v1116 = vadd.f32 0.0, %v1115
        %1117 = vdwg.mxu0
        %v1118 = vand.u32 %v253, 4294901760
        %v1119 = vsub.f32 %v253, %v1118
        %v1120 = vand.u32 %v1119, 4294901760
        %v1121 = vsub.f32 %v1119, %v1120
        %v1122 = vand.u32 %v1121, 4294901760
        %1123 = vmatprep.subr.mxu0 %v1122
        %v1124 = vand.u32 %v252, 4294901760
        %v1125 = vsub.f32 %v252, %v1124
        %v1126 = vand.u32 %v1125, 4294901760
        %v1127 = vsub.f32 %v1125, %v1126
        %v1128 = vand.u32 %v1127, 4294901760
        %1129 = vmatpush1.msra.mxu0 %v1128
        %v1130 = vand.u32 %v257, 4294901760
        %v1131 = vsub.f32 %v257, %v1130
        %v1132 = vand.u32 %v1131, 4294901760
        %v1133 = vsub.f32 %v1131, %v1132
        %v1134 = vand.u32 %v1133, 4294901760
        %1135 = vmatprep.subr.mxu0 %v1134
        %v1136 = vand.u32 %v256, 4294901760
        %v1137 = vsub.f32 %v256, %v1136
        %v1138 = vand.u32 %v1137, 4294901760
        %v1139 = vsub.f32 %v1137, %v1138
        %v1140 = vand.u32 %v1139, 4294901760
        %1141 = vmatpush1.msra.mxu0 %v1140
        %v1142 = vand.u32 %v261, 4294901760
        %v1143 = vsub.f32 %v261, %v1142
        %v1144 = vand.u32 %v1143, 4294901760
        %v1145 = vsub.f32 %v1143, %v1144
        %v1146 = vand.u32 %v1145, 4294901760
        %1147 = vmatprep.subr.mxu0 %v1146
        %v1148 = vand.u32 %v260, 4294901760
        %v1149 = vsub.f32 %v260, %v1148
        %v1150 = vand.u32 %v1149, 4294901760
        %v1151 = vsub.f32 %v1149, %v1150
        %v1152 = vand.u32 %v1151, 4294901760
        %1153 = vmatpush1.msra.mxu0 %v1152
        %v1154 = vand.u32 %v265, 4294901760
        %v1155 = vsub.f32 %v265, %v1154
        %v1156 = vand.u32 %v1155, 4294901760
        %v1157 = vsub.f32 %v1155, %v1156
        %v1158 = vand.u32 %v1157, 4294901760
        %1159 = vmatprep.subr.mxu0 %v1158
        %v1160 = vand.u32 %v264, 4294901760
        %v1161 = vsub.f32 %v264, %v1160
        %v1162 = vand.u32 %v1161, 4294901760
        %v1163 = vsub.f32 %v1161, %v1162
        %v1164 = vand.u32 %v1163, 4294901760
        %1165 = vmatpush1.msra.mxu0 %v1164
        %v1166 = vand.u32 %v269, 4294901760
        %v1167 = vsub.f32 %v269, %v1166
        %v1168 = vand.u32 %v1167, 4294901760
        %v1169 = vsub.f32 %v1167, %v1168
        %v1170 = vand.u32 %v1169, 4294901760
        %1171 = vmatprep.subr.mxu0 %v1170
        %v1172 = vand.u32 %v268, 4294901760
        %v1173 = vsub.f32 %v268, %v1172
        %v1174 = vand.u32 %v1173, 4294901760
        %v1175 = vsub.f32 %v1173, %v1174
        %v1176 = vand.u32 %v1175, 4294901760
        %1177 = vmatpush1.msra.mxu0 %v1176
        %1178 = vmatprep.subr.mxu0 0.0
        %1179 = vmatpush1.msra.mxu0 0.0
        %1180 = vmatprep.subr.mxu0 0.0
        %1181 = vmatpush1.msra.mxu0 0.0
        %1182 = vmatprep.subr.mxu0 0.0
        %1183 = vmatpush1.msra.mxu0 0.0
        %1184 = vmatprep.subr.mxu0 0.0
        %1185 = vmatpush1.msra.mxu0 0.0
        %1186 = vmatprep.subr.mxu0 0.0
        %1187 = vmatpush1.msra.mxu0 0.0
        %1188 = vmatprep.subr.mxu0 0.0
        %1189 = vmatpush1.msra.mxu0 0.0
        %1190 = vmatprep.subr.mxu0 0.0
        %1191 = vmatpush1.msra.mxu0 0.0
        %1192 = vmatprep.subr.mxu0 0.0
        %1193 = vmatpush1.msra.mxu0 0.0
        %1194 = vmatprep.subr.mxu0 0.0
        %1195 = vmatpush1.msra.mxu0 0.0
        %1196 = vmatprep.subr.mxu0 0.0
        %1197 = vmatpush1.msra.mxu0 0.0
        %1198 = vmatprep.subr.mxu0 0.0
        %1199 = vmatpush1.msra.mxu0 0.0
        %1200 = vmatprep.subr.mxu0 0.0
        %1201 = vmatpush1.msra.mxu0 0.0
        %1202 = vmatprep.subr.mxu0 0.0
        %1203 = vmatpush1.msra.mxu0 0.0
        %1204 = vmatprep.subr.mxu0 0.0
        %1205 = vmatpush1.msra.mxu0 0.0
        %1206 = vmatprep.subr.mxu0 0.0
        %1207 = vmatpush1.msra.mxu0 0.0
        %1208 = vmatprep.subr.mxu0 0.0
        %1209 = vmatpush1.msra.mxu0 0.0
        %1210 = vmatprep.subr.mxu0 0.0
        %1211 = vmatpush1.msra.mxu0 0.0
        %1212 = vmatprep.subr.mxu0 0.0
        %1213 = vmatpush1.msra.mxu0 0.0
        %1214 = vmatprep.subr.mxu0 0.0
        %1215 = vmatpush1.msra.mxu0 0.0
        %1216 = vmatprep.subr.mxu0 0.0
        %1217 = vmatpush1.msra.mxu0 0.0
        %1218 = vmatprep.subr.mxu0 0.0
        %1219 = vmatpush1.msra.mxu0 0.0
        %1220 = vmatprep.subr.mxu0 0.0
        %1221 = vmatpush1.msra.mxu0 0.0
        %1222 = vmatprep.subr.mxu0 0.0
        %1223 = vmatpush1.msra.mxu0 0.0
        %1224 = vmatprep.subr.mxu0 0.0
        %1225 = vmatpush1.msra.mxu0 0.0
        %1226 = vmatprep.subr.mxu0 0.0
        %1227 = vmatpush1.msra.mxu0 0.0
        %1228 = vmatprep.subr.mxu0 0.0
        %1229 = vmatpush1.msra.mxu0 0.0
        %1230 = vmatprep.subr.mxu0 0.0
        %1231 = vmatpush1.msra.mxu0 0.0
        %1232 = vmatprep.mubr.f32.mxu0 0.0
        %v1233 = vand.u32 %v272, 4294901760
        %1234 = vmatmul.mubr.f32.gmra.mrb[0].mxu0 %v1233
        %v1235 = vpop.f32.mrb[0].mxu0
        %v1236 = vadd.f32 %v1081, %v1235
        %v1237 = vpop.f32.mrb[0].mxu0
        %v1238 = vadd.f32 %v1083, %v1237
        %1239 = vmatprep.mubr.f32.mxu0 0.0
        %v1240 = vand.u32 %v275, 4294901760
        %1241 = vmatmul.mubr.f32.gmra.mrb[0].mxu0 %v1240
        %v1242 = vpop.f32.mrb[0].mxu0
        %v1243 = vadd.f32 %v1092, %v1242
        %v1244 = vpop.f32.mrb[0].mxu0
        %v1245 = vadd.f32 %v1094, %v1244
        %1246 = vmatprep.mubr.f32.mxu0 0.0
        %v1247 = vand.u32 %v278, 4294901760
        %1248 = vmatmul.mubr.f32.gmra.mrb[0].mxu0 %v1247
        %v1249 = vpop.f32.mrb[0].mxu0
        %v1250 = vadd.f32 %v1103, %v1249
        %v1251 = vpop.f32.mrb[0].mxu0
        %v1252 = vadd.f32 %v1105, %v1251
        %1253 = vmatprep.mubr.f32.mxu0 0.0
        %v1254 = vand.u32 %v281, 4294901760
        %1255 = vmatmul.mubr.f32.gmra.mrb[0].mxu0 %v1254
        %v1256 = vpop.f32.mrb[0].mxu0
        %v1257 = vadd.f32 %v1114, %v1256
        %v1258 = vpop.f32.mrb[0].mxu0
        %v1259 = vadd.f32 %v1116, %v1258
        %1260 = vdwg.mxu0
        %v1261 = vand.u32 %v253, 4294901760
        %v1262 = vsub.f32 %v253, %v1261
        %1263 = vmatprep.subr.mxu0 %v1262
        %v1264 = vand.u32 %v252, 4294901760
        %v1265 = vsub.f32 %v252, %v1264
        %1266 = vmatpush1.msra.mxu0 %v1265
        %v1267 = vand.u32 %v257, 4294901760
        %v1268 = vsub.f32 %v257, %v1267
        %1269 = vmatprep.subr.mxu0 %v1268
        %v1270 = vand.u32 %v256, 4294901760
        %v1271 = vsub.f32 %v256, %v1270
        %1272 = vmatpush1.msra.mxu0 %v1271
        %v1273 = vand.u32 %v261, 4294901760
        %v1274 = vsub.f32 %v261, %v1273
        %1275 = vmatprep.subr.mxu0 %v1274
        %v1276 = vand.u32 %v260, 4294901760
        %v1277 = vsub.f32 %v260, %v1276
        %1278 = vmatpush1.msra.mxu0 %v1277
        %v1279 = vand.u32 %v265, 4294901760
        %v1280 = vsub.f32 %v265, %v1279
        %1281 = vmatprep.subr.mxu0 %v1280
        %v1282 = vand.u32 %v264, 4294901760
        %v1283 = vsub.f32 %v264, %v1282
        %1284 = vmatpush1.msra.mxu0 %v1283
        %v1285 = vand.u32 %v269, 4294901760
        %v1286 = vsub.f32 %v269, %v1285
        %1287 = vmatprep.subr.mxu0 %v1286
        %v1288 = vand.u32 %v268, 4294901760
        %v1289 = vsub.f32 %v268, %v1288
        %1290 = vmatpush1.msra.mxu0 %v1289
        %1291 = vmatprep.subr.mxu0 0.0
        %1292 = vmatpush1.msra.mxu0 0.0
        %1293 = vmatprep.subr.mxu0 0.0
        %1294 = vmatpush1.msra.mxu0 0.0
        %1295 = vmatprep.subr.mxu0 0.0
        %1296 = vmatpush1.msra.mxu0 0.0
        %1297 = vmatprep.subr.mxu0 0.0
        %1298 = vmatpush1.msra.mxu0 0.0
        %1299 = vmatprep.subr.mxu0 0.0
        %1300 = vmatpush1.msra.mxu0 0.0
        %1301 = vmatprep.subr.mxu0 0.0
        %1302 = vmatpush1.msra.mxu0 0.0
        %1303 = vmatprep.subr.mxu0 0.0
        %1304 = vmatpush1.msra.mxu0 0.0
        %1305 = vmatprep.subr.mxu0 0.0
        %1306 = vmatpush1.msra.mxu0 0.0
        %1307 = vmatprep.subr.mxu0 0.0
        %1308 = vmatpush1.msra.mxu0 0.0
        %1309 = vmatprep.subr.mxu0 0.0
        %1310 = vmatpush1.msra.mxu0 0.0
        %1311 = vmatprep.subr.mxu0 0.0
        %1312 = vmatpush1.msra.mxu0 0.0
        %1313 = vmatprep.subr.mxu0 0.0
        %1314 = vmatpush1.msra.mxu0 0.0
        %1315 = vmatprep.subr.mxu0 0.0
        %1316 = vmatpush1.msra.mxu0 0.0
        %1317 = vmatprep.subr.mxu0 0.0
        %1318 = vmatpush1.msra.mxu0 0.0
        %1319 = vmatprep.subr.mxu0 0.0
        %1320 = vmatpush1.msra.mxu0 0.0
        %1321 = vmatprep.subr.mxu0 0.0
        %1322 = vmatpush1.msra.mxu0 0.0
        %1323 = vmatprep.subr.mxu0 0.0
        %1324 = vmatpush1.msra.mxu0 0.0
        %1325 = vmatprep.subr.mxu0 0.0
        %1326 = vmatpush1.msra.mxu0 0.0
        %1327 = vmatprep.subr.mxu0 0.0
        %1328 = vmatpush1.msra.mxu0 0.0
        %1329 = vmatprep.subr.mxu0 0.0
        %1330 = vmatpush1.msra.mxu0 0.0
        %1331 = vmatprep.subr.mxu0 0.0
        %1332 = vmatpush1.msra.mxu0 0.0
        %1333 = vmatprep.subr.mxu0 0.0
        %1334 = vmatpush1.msra.mxu0 0.0
        %1335 = vmatprep.subr.mxu0 0.0
        %1336 = vmatpush1.msra.mxu0 0.0
        %1337 = vmatprep.subr.mxu0 0.0
        %1338 = vmatpush1.msra.mxu0 0.0
        %1339 = vmatprep.subr.mxu0 0.0
        %1340 = vmatpush1.msra.mxu0 0.0
        %1341 = vmatprep.subr.mxu0 0.0
        %1342 = vmatpush1.msra.mxu0 0.0
        %1343 = vmatprep.subr.mxu0 0.0
        %1344 = vmatpush1.msra.mxu0 0.0
        %1345 = vmatprep.mubr.f32.mxu0 0.0
        %v1346 = vand.u32 %v272, 4294901760
        %v1347 = vsub.f32 %v272, %v1346
        %1348 = vmatmul.mubr.f32.gmra.mrb[0].mxu0 %v1347
        %v1349 = vpop.f32.mrb[0].mxu0
        %v1350 = vadd.f32 %v1236, %v1349
        %v1351 = vpop.f32.mrb[0].mxu0
        %v1352 = vadd.f32 %v1238, %v1351
        %1353 = vmatprep.mubr.f32.mxu0 0.0
        %v1354 = vand.u32 %v275, 4294901760
        %v1355 = vsub.f32 %v275, %v1354
        %1356 = vmatmul.mubr.f32.gmra.mrb[0].mxu0 %v1355
        %v1357 = vpop.f32.mrb[0].mxu0
        %v1358 = vadd.f32 %v1243, %v1357
        %v1359 = vpop.f32.mrb[0].mxu0
        %v1360 = vadd.f32 %v1245, %v1359
        %1361 = vmatprep.mubr.f32.mxu0 0.0
        %v1362 = vand.u32 %v278, 4294901760
        %v1363 = vsub.f32 %v278, %v1362
        %1364 = vmatmul.mubr.f32.gmra.mrb[0].mxu0 %v1363
        %v1365 = vpop.f32.mrb[0].mxu0
        %v1366 = vadd.f32 %v1250, %v1365
        %v1367 = vpop.f32.mrb[0].mxu0
        %v1368 = vadd.f32 %v1252, %v1367
        %1369 = vmatprep.mubr.f32.mxu0 0.0
        %v1370 = vand.u32 %v281, 4294901760
        %v1371 = vsub.f32 %v281, %v1370
        %1372 = vmatmul.mubr.f32.gmra.mrb[0].mxu0 %v1371
        %v1373 = vpop.f32.mrb[0].mxu0
        %v1374 = vadd.f32 %v1257, %v1373
        %v1375 = vpop.f32.mrb[0].mxu0
        %v1376 = vadd.f32 %v1259, %v1375
        %1377 = vdwg.mxu0
        %v1378 = vand.u32 %v253, 4294901760
        %1379 = vmatprep.subr.mxu0 %v1378
        %v1380 = vand.u32 %v252, 4294901760
        %1381 = vmatpush1.msra.mxu0 %v1380
        %v1382 = vand.u32 %v257, 4294901760
        %1383 = vmatprep.subr.mxu0 %v1382
        %v1384 = vand.u32 %v256, 4294901760
        %1385 = vmatpush1.msra.mxu0 %v1384
        %v1386 = vand.u32 %v261, 4294901760
        %1387 = vmatprep.subr.mxu0 %v1386
        %v1388 = vand.u32 %v260, 4294901760
        %1389 = vmatpush1.msra.mxu0 %v1388
        %v1390 = vand.u32 %v265, 4294901760
        %1391 = vmatprep.subr.mxu0 %v1390
        %v1392 = vand.u32 %v264, 4294901760
        %1393 = vmatpush1.msra.mxu0 %v1392
        %v1394 = vand.u32 %v269, 4294901760
        %1395 = vmatprep.subr.mxu0 %v1394
        %v1396 = vand.u32 %v268, 4294901760
        %1397 = vmatpush1.msra.mxu0 %v1396
        %1398 = vmatprep.subr.mxu0 0.0
        %1399 = vmatpush1.msra.mxu0 0.0
        %1400 = vmatprep.subr.mxu0 0.0
        %1401 = vmatpush1.msra.mxu0 0.0
        %1402 = vmatprep.subr.mxu0 0.0
        %1403 = vmatpush1.msra.mxu0 0.0
        %1404 = vmatprep.subr.mxu0 0.0
        %1405 = vmatpush1.msra.mxu0 0.0
        %1406 = vmatprep.subr.mxu0 0.0
        %1407 = vmatpush1.msra.mxu0 0.0
        %1408 = vmatprep.subr.mxu0 0.0
        %1409 = vmatpush1.msra.mxu0 0.0
        %1410 = vmatprep.subr.mxu0 0.0
        %1411 = vmatpush1.msra.mxu0 0.0
        %1412 = vmatprep.subr.mxu0 0.0
        %1413 = vmatpush1.msra.mxu0 0.0
        %1414 = vmatprep.subr.mxu0 0.0
        %1415 = vmatpush1.msra.mxu0 0.0
        %1416 = vmatprep.subr.mxu0 0.0
        %1417 = vmatpush1.msra.mxu0 0.0
        %1418 = vmatprep.subr.mxu0 0.0
        %1419 = vmatpush1.msra.mxu0 0.0
        %1420 = vmatprep.subr.mxu0 0.0
        %1421 = vmatpush1.msra.mxu0 0.0
        %1422 = vmatprep.subr.mxu0 0.0
        %1423 = vmatpush1.msra.mxu0 0.0
        %1424 = vmatprep.subr.mxu0 0.0
        %1425 = vmatpush1.msra.mxu0 0.0
        %1426 = vmatprep.subr.mxu0 0.0
        %1427 = vmatpush1.msra.mxu0 0.0
        %1428 = vmatprep.subr.mxu0 0.0
        %1429 = vmatpush1.msra.mxu0 0.0
        %1430 = vmatprep.subr.mxu0 0.0
        %1431 = vmatpush1.msra.mxu0 0.0
        %1432 = vmatprep.subr.mxu0 0.0
        %1433 = vmatpush1.msra.mxu0 0.0
        %1434 = vmatprep.subr.mxu0 0.0
        %1435 = vmatpush1.msra.mxu0 0.0
        %1436 = vmatprep.subr.mxu0 0.0
        %1437 = vmatpush1.msra.mxu0 0.0
        %1438 = vmatprep.subr.mxu0 0.0
        %1439 = vmatpush1.msra.mxu0 0.0
        %1440 = vmatprep.subr.mxu0 0.0
        %1441 = vmatpush1.msra.mxu0 0.0
        %1442 = vmatprep.subr.mxu0 0.0
        %1443 = vmatpush1.msra.mxu0 0.0
        %1444 = vmatprep.subr.mxu0 0.0
        %1445 = vmatpush1.msra.mxu0 0.0
        %1446 = vmatprep.subr.mxu0 0.0
        %1447 = vmatpush1.msra.mxu0 0.0
        %1448 = vmatprep.subr.mxu0 0.0
        %1449 = vmatpush1.msra.mxu0 0.0
        %1450 = vmatprep.subr.mxu0 0.0
        %1451 = vmatpush1.msra.mxu0 0.0
        %1452 = vmatprep.mubr.f32.mxu0 0.0
        %v1453 = vand.u32 %v272, 4294901760
        %v1454 = vsub.f32 %v272, %v1453
        %v1455 = vand.u32 %v1454, 4294901760
        %1456 = vmatmul.mubr.f32.gmra.mrb[0].mxu0 %v1455
        %v1457 = vpop.f32.mrb[0].mxu0
        %v1458 = vadd.f32 %v1350, %v1457
        %v1459 = vpop.f32.mrb[0].mxu0
        %v1460 = vadd.f32 %v1352, %v1459
        %1461 = vmatprep.mubr.f32.mxu0 0.0
        %v1462 = vand.u32 %v275, 4294901760
        %v1463 = vsub.f32 %v275, %v1462
        %v1464 = vand.u32 %v1463, 4294901760
        %1465 = vmatmul.mubr.f32.gmra.mrb[0].mxu0 %v1464
        %v1466 = vpop.f32.mrb[0].mxu0
        %v1467 = vadd.f32 %v1358, %v1466
        %v1468 = vpop.f32.mrb[0].mxu0
        %v1469 = vadd.f32 %v1360, %v1468
        %1470 = vmatprep.mubr.f32.mxu0 0.0
        %v1471 = vand.u32 %v278, 4294901760
        %v1472 = vsub.f32 %v278, %v1471
        %v1473 = vand.u32 %v1472, 4294901760
        %1474 = vmatmul.mubr.f32.gmra.mrb[0].mxu0 %v1473
        %v1475 = vpop.f32.mrb[0].mxu0
        %v1476 = vadd.f32 %v1366, %v1475
        %v1477 = vpop.f32.mrb[0].mxu0
        %v1478 = vadd.f32 %v1368, %v1477
        %1479 = vmatprep.mubr.f32.mxu0 0.0
        %v1480 = vand.u32 %v281, 4294901760
        %v1481 = vsub.f32 %v281, %v1480
        %v1482 = vand.u32 %v1481, 4294901760
        %1483 = vmatmul.mubr.f32.gmra.mrb[0].mxu0 %v1482
        %v1484 = vpop.f32.mrb[0].mxu0
        %v1485 = vadd.f32 %v1374, %v1484
        %v1486 = vpop.f32.mrb[0].mxu0
        %v1487 = vadd.f32 %v1376, %v1486
        %1488 = vdwg.mxu0
        %v1489 = vand.u32 %v253, 4294901760
        %v1490 = vsub.f32 %v253, %v1489
        %v1491 = vand.u32 %v1490, 4294901760
        %1492 = vmatprep.subr.mxu0 %v1491
        %v1493 = vand.u32 %v252, 4294901760
        %v1494 = vsub.f32 %v252, %v1493
        %v1495 = vand.u32 %v1494, 4294901760
        %1496 = vmatpush1.msra.mxu0 %v1495
        %v1497 = vand.u32 %v257, 4294901760
        %v1498 = vsub.f32 %v257, %v1497
        %v1499 = vand.u32 %v1498, 4294901760
        %1500 = vmatprep.subr.mxu0 %v1499
        %v1501 = vand.u32 %v256, 4294901760
        %v1502 = vsub.f32 %v256, %v1501
        %v1503 = vand.u32 %v1502, 4294901760
        %1504 = vmatpush1.msra.mxu0 %v1503
        %v1505 = vand.u32 %v261, 4294901760
        %v1506 = vsub.f32 %v261, %v1505
        %v1507 = vand.u32 %v1506, 4294901760
        %1508 = vmatprep.subr.mxu0 %v1507
        %v1509 = vand.u32 %v260, 4294901760
        %v1510 = vsub.f32 %v260, %v1509
        %v1511 = vand.u32 %v1510, 4294901760
        %1512 = vmatpush1.msra.mxu0 %v1511
        %v1513 = vand.u32 %v265, 4294901760
        %v1514 = vsub.f32 %v265, %v1513
        %v1515 = vand.u32 %v1514, 4294901760
        %1516 = vmatprep.subr.mxu0 %v1515
        %v1517 = vand.u32 %v264, 4294901760
        %v1518 = vsub.f32 %v264, %v1517
        %v1519 = vand.u32 %v1518, 4294901760
        %1520 = vmatpush1.msra.mxu0 %v1519
        %v1521 = vand.u32 %v269, 4294901760
        %v1522 = vsub.f32 %v269, %v1521
        %v1523 = vand.u32 %v1522, 4294901760
        %1524 = vmatprep.subr.mxu0 %v1523
        %v1525 = vand.u32 %v268, 4294901760
        %v1526 = vsub.f32 %v268, %v1525
        %v1527 = vand.u32 %v1526, 4294901760
        %1528 = vmatpush1.msra.mxu0 %v1527
        %1529 = vmatprep.subr.mxu0 0.0
        %1530 = vmatpush1.msra.mxu0 0.0
        %1531 = vmatprep.subr.mxu0 0.0
        %1532 = vmatpush1.msra.mxu0 0.0
        %1533 = vmatprep.subr.mxu0 0.0
        %1534 = vmatpush1.msra.mxu0 0.0
        %1535 = vmatprep.subr.mxu0 0.0
        %1536 = vmatpush1.msra.mxu0 0.0
        %1537 = vmatprep.subr.mxu0 0.0
        %1538 = vmatpush1.msra.mxu0 0.0
        %1539 = vmatprep.subr.mxu0 0.0
        %1540 = vmatpush1.msra.mxu0 0.0
        %1541 = vmatprep.subr.mxu0 0.0
        %1542 = vmatpush1.msra.mxu0 0.0
        %1543 = vmatprep.subr.mxu0 0.0
        %1544 = vmatpush1.msra.mxu0 0.0
        %1545 = vmatprep.subr.mxu0 0.0
        %1546 = vmatpush1.msra.mxu0 0.0
        %1547 = vmatprep.subr.mxu0 0.0
        %1548 = vmatpush1.msra.mxu0 0.0
        %1549 = vmatprep.subr.mxu0 0.0
        %1550 = vmatpush1.msra.mxu0 0.0
        %1551 = vmatprep.subr.mxu0 0.0
        %1552 = vmatpush1.msra.mxu0 0.0
        %1553 = vmatprep.subr.mxu0 0.0
        %1554 = vmatpush1.msra.mxu0 0.0
        %1555 = vmatprep.subr.mxu0 0.0
        %1556 = vmatpush1.msra.mxu0 0.0
        %1557 = vmatprep.subr.mxu0 0.0
        %1558 = vmatpush1.msra.mxu0 0.0
        %1559 = vmatprep.subr.mxu0 0.0
        %1560 = vmatpush1.msra.mxu0 0.0
        %1561 = vmatprep.subr.mxu0 0.0
        %1562 = vmatpush1.msra.mxu0 0.0
        %1563 = vmatprep.subr.mxu0 0.0
        %1564 = vmatpush1.msra.mxu0 0.0
        %1565 = vmatprep.subr.mxu0 0.0
        %1566 = vmatpush1.msra.mxu0 0.0
        %1567 = vmatprep.subr.mxu0 0.0
        %1568 = vmatpush1.msra.mxu0 0.0
        %1569 = vmatprep.subr.mxu0 0.0
        %1570 = vmatpush1.msra.mxu0 0.0
        %1571 = vmatprep.subr.mxu0 0.0
        %1572 = vmatpush1.msra.mxu0 0.0
        %1573 = vmatprep.subr.mxu0 0.0
        %1574 = vmatpush1.msra.mxu0 0.0
        %1575 = vmatprep.subr.mxu0 0.0
        %1576 = vmatpush1.msra.mxu0 0.0
        %1577 = vmatprep.subr.mxu0 0.0
        %1578 = vmatpush1.msra.mxu0 0.0
        %1579 = vmatprep.subr.mxu0 0.0
        %1580 = vmatpush1.msra.mxu0 0.0
        %1581 = vmatprep.subr.mxu0 0.0
        %1582 = vmatpush1.msra.mxu0 0.0
        %1583 = vmatprep.mubr.f32.mxu0 0.0
        %v1584 = vand.u32 %v272, 4294901760
        %1585 = vmatmul.mubr.f32.gmra.mrb[0].mxu0 %v1584
        %v1586 = vpop.f32.mrb[0].mxu0
        %v1587 = vadd.f32 %v1458, %v1586
        %v1588 = vpop.f32.mrb[0].mxu0
        %v1589 = vadd.f32 %v1460, %v1588
        %1590 = vmatprep.mubr.f32.mxu0 0.0
        %v1591 = vand.u32 %v275, 4294901760
        %1592 = vmatmul.mubr.f32.gmra.mrb[0].mxu0 %v1591
        %v1593 = vpop.f32.mrb[0].mxu0
        %v1594 = vadd.f32 %v1467, %v1593
        %v1595 = vpop.f32.mrb[0].mxu0
        %v1596 = vadd.f32 %v1469, %v1595
        %1597 = vmatprep.mubr.f32.mxu0 0.0
        %v1598 = vand.u32 %v278, 4294901760
        %1599 = vmatmul.mubr.f32.gmra.mrb[0].mxu0 %v1598
        %v1600 = vpop.f32.mrb[0].mxu0
        %v1601 = vadd.f32 %v1476, %v1600
        %v1602 = vpop.f32.mrb[0].mxu0
        %v1603 = vadd.f32 %v1478, %v1602
        %1604 = vmatprep.mubr.f32.mxu0 0.0
        %v1605 = vand.u32 %v281, 4294901760
        %1606 = vmatmul.mubr.f32.gmra.mrb[0].mxu0 %v1605
        %v1607 = vpop.f32.mrb[0].mxu0
        %v1608 = vadd.f32 %v1485, %v1607
        %v1609 = vpop.f32.mrb[0].mxu0
        %v1610 = vadd.f32 %v1487, %v1609
        %1611 = vdwg.mxu0
        %v1612 = vand.u32 %v253, 4294901760
        %1613 = vmatprep.subr.mxu0 %v1612
        %v1614 = vand.u32 %v252, 4294901760
        %1615 = vmatpush1.msra.mxu0 %v1614
        %v1616 = vand.u32 %v257, 4294901760
        %1617 = vmatprep.subr.mxu0 %v1616
        %v1618 = vand.u32 %v256, 4294901760
        %1619 = vmatpush1.msra.mxu0 %v1618
        %v1620 = vand.u32 %v261, 4294901760
        %1621 = vmatprep.subr.mxu0 %v1620
        %v1622 = vand.u32 %v260, 4294901760
        %1623 = vmatpush1.msra.mxu0 %v1622
        %v1624 = vand.u32 %v265, 4294901760
        %1625 = vmatprep.subr.mxu0 %v1624
        %v1626 = vand.u32 %v264, 4294901760
        %1627 = vmatpush1.msra.mxu0 %v1626
        %v1628 = vand.u32 %v269, 4294901760
        %1629 = vmatprep.subr.mxu0 %v1628
        %v1630 = vand.u32 %v268, 4294901760
        %1631 = vmatpush1.msra.mxu0 %v1630
        %1632 = vmatprep.subr.mxu0 0.0
        %1633 = vmatpush1.msra.mxu0 0.0
        %1634 = vmatprep.subr.mxu0 0.0
        %1635 = vmatpush1.msra.mxu0 0.0
        %1636 = vmatprep.subr.mxu0 0.0
        %1637 = vmatpush1.msra.mxu0 0.0
        %1638 = vmatprep.subr.mxu0 0.0
        %1639 = vmatpush1.msra.mxu0 0.0
        %1640 = vmatprep.subr.mxu0 0.0
        %1641 = vmatpush1.msra.mxu0 0.0
        %1642 = vmatprep.subr.mxu0 0.0
        %1643 = vmatpush1.msra.mxu0 0.0
        %1644 = vmatprep.subr.mxu0 0.0
        %1645 = vmatpush1.msra.mxu0 0.0
        %1646 = vmatprep.subr.mxu0 0.0
        %1647 = vmatpush1.msra.mxu0 0.0
        %1648 = vmatprep.subr.mxu0 0.0
        %1649 = vmatpush1.msra.mxu0 0.0
        %1650 = vmatprep.subr.mxu0 0.0
        %1651 = vmatpush1.msra.mxu0 0.0
        %1652 = vmatprep.subr.mxu0 0.0
        %1653 = vmatpush1.msra.mxu0 0.0
        %1654 = vmatprep.subr.mxu0 0.0
        %1655 = vmatpush1.msra.mxu0 0.0
        %1656 = vmatprep.subr.mxu0 0.0
        %1657 = vmatpush1.msra.mxu0 0.0
        %1658 = vmatprep.subr.mxu0 0.0
        %1659 = vmatpush1.msra.mxu0 0.0
        %1660 = vmatprep.subr.mxu0 0.0
        %1661 = vmatpush1.msra.mxu0 0.0
        %1662 = vmatprep.subr.mxu0 0.0
        %1663 = vmatpush1.msra.mxu0 0.0
        %1664 = vmatprep.subr.mxu0 0.0
        %1665 = vmatpush1.msra.mxu0 0.0
        %1666 = vmatprep.subr.mxu0 0.0
        %1667 = vmatpush1.msra.mxu0 0.0
        %1668 = vmatprep.subr.mxu0 0.0
        %1669 = vmatpush1.msra.mxu0 0.0
        %1670 = vmatprep.subr.mxu0 0.0
        %1671 = vmatpush1.msra.mxu0 0.0
        %1672 = vmatprep.subr.mxu0 0.0
        %1673 = vmatpush1.msra.mxu0 0.0
        %1674 = vmatprep.subr.mxu0 0.0
        %1675 = vmatpush1.msra.mxu0 0.0
        %1676 = vmatprep.subr.mxu0 0.0
        %1677 = vmatpush1.msra.mxu0 0.0
        %1678 = vmatprep.subr.mxu0 0.0
        %1679 = vmatpush1.msra.mxu0 0.0
        %1680 = vmatprep.subr.mxu0 0.0
        %1681 = vmatpush1.msra.mxu0 0.0
        %1682 = vmatprep.subr.mxu0 0.0
        %1683 = vmatpush1.msra.mxu0 0.0
        %1684 = vmatprep.subr.mxu0 0.0
        %1685 = vmatpush1.msra.mxu0 0.0
        %1686 = vmatprep.mubr.f32.mxu0 0.0
        %v1687 = vand.u32 %v272, 4294901760
        %1688 = vmatmul.mubr.f32.gmra.mrb[0].mxu0 %v1687
        %v1689 = vpop.f32.mrb[0].mxu0
        %v1690 = vadd.f32 %v1587, %v1689
        %v1691 = vpop.f32.mrb[0].mxu0
        %v1692 = vadd.f32 %v1589, %v1691
        %1693 = vmatprep.mubr.f32.mxu0 0.0
        %v1694 = vand.u32 %v275, 4294901760
        %1695 = vmatmul.mubr.f32.gmra.mrb[0].mxu0 %v1694
        %v1696 = vpop.f32.mrb[0].mxu0
        %v1697 = vadd.f32 %v1594, %v1696
        %v1698 = vpop.f32.mrb[0].mxu0
        %v1699 = vadd.f32 %v1596, %v1698
        %1700 = vmatprep.mubr.f32.mxu0 0.0
        %v1701 = vand.u32 %v278, 4294901760
        %1702 = vmatmul.mubr.f32.gmra.mrb[0].mxu0 %v1701
        %v1703 = vpop.f32.mrb[0].mxu0
        %v1704 = vadd.f32 %v1601, %v1703
        %v1705 = vpop.f32.mrb[0].mxu0
        %v1706 = vadd.f32 %v1603, %v1705
        %1707 = vmatprep.mubr.f32.mxu0 0.0
        %v1708 = vand.u32 %v281, 4294901760
        %1709 = vmatmul.mubr.f32.gmra.mrb[0].mxu0 %v1708
        %v1710 = vpop.f32.mrb[0].mxu0
        %v1711 = vadd.f32 %v1608, %v1710
        %v1712 = vpop.f32.mrb[0].mxu0
        %v1713 = vadd.f32 %v1610, %v1712
        %1714 = vdwg.mxu0
        %v1715 = vld [vmem:[%s202] sm:$0xff]
        %v1716 = vld [vmem:[%s202 + $0x8] sm:$0xff]
        %v1717 = vld [vmem:[%s202 + $0x10] sm:$0xff]
        %v1718 = vld [vmem:[%s202 + $0x18] sm:$0xff]
        %v1719 = vld [vmem:[%s202 + $0x20] sm:$0xff]
        %v1720 = vld [vmem:[%s202 + $0x28] sm:$0xff]
        %v1721 = vld [vmem:[%s202 + $0x30] sm:$0xff]
        %v1722 = vld [vmem:[%s202 + $0x38] sm:$0xff]
        %v1723 = vld [vmem:[%s202 + $0x40] sm:$0xff]
        %v1724 = vld [vmem:[%s202 + $0x48] sm:$0xff]
        %v1725 = vld [vmem:[%s202 + $0x50] sm:$0xff]
        %v1726 = vld [vmem:[%s202 + $0x58] sm:$0xff]
        %v1727 = vld [vmem:[%s202 + $0x60] sm:$0xff]
        %v1728 = vld [vmem:[%s202 + $0x68] sm:$0xff]
        %v1729 = vld [vmem:[%s202 + $0x70] sm:$0xff]
        %v1730 = vld [vmem:[%s202 + $0x78] sm:$0xff]
        %v1731 = vmul.f32 %v1715, %v974
        %v1732 = vmul.f32 %v1716, %v976
        %v1733 = vmul.f32 %v1717, %v1690
        %v1734 = vmul.f32 %v1718, %v1692
        %v1735 = vmul.f32 %v1719, %v981
        %v1736 = vmul.f32 %v1720, %v983
        %v1737 = vmul.f32 %v1721, %v1697
        %v1738 = vmul.f32 %v1722, %v1699
        %v1739 = vmul.f32 %v1723, %v988
        %v1740 = vmul.f32 %v1724, %v990
        %v1741 = vmul.f32 %v1725, %v1704
        %v1742 = vmul.f32 %v1726, %v1706
        %v1743 = vmul.f32 %v1727, %v995
        %v1744 = vmul.f32 %v1728, %v997
        %v1745 = vmul.f32 %v1729, %v1711
        %v1746 = vmul.f32 %v1730, %v1713
        %v1747 = vadd.f32 %v1731, %v1735
        %v1748 = vadd.f32 %v1747, %v1739
        %v1749 = vadd.f32 %v1748, %v1743
        %v1750 = vrot.slane %v1749, 4
        %v1751 = vadd.f32 %v1749, %v1750
        %v1752 = vrot.slane %v1751, 2
        %v1753 = vadd.f32 %v1751, %v1752
        %v1754 = vrot.slane %v1753, 1
        %v1755 = vadd.f32 %v1753, %v1754
        %v1756 = vadd.f32 %v1732, %v1736
        %v1757 = vadd.f32 %v1756, %v1740
        %v1758 = vadd.f32 %v1757, %v1744
        %v1759 = vrot.slane %v1758, 4
        %v1760 = vadd.f32 %v1758, %v1759
        %v1761 = vrot.slane %v1760, 2
        %v1762 = vadd.f32 %v1760, %v1761
        %v1763 = vrot.slane %v1762, 1
        %v1764 = vadd.f32 %v1762, %v1763
        %v1765 = vadd.f32 %v1733, %v1737
        %v1766 = vadd.f32 %v1765, %v1741
        %v1767 = vadd.f32 %v1766, %v1745
        %v1768 = vrot.slane %v1767, 4
        %v1769 = vadd.f32 %v1767, %v1768
        %v1770 = vrot.slane %v1769, 2
        %v1771 = vadd.f32 %v1769, %v1770
        %v1772 = vrot.slane %v1771, 1
        %v1773 = vadd.f32 %v1771, %v1772
        %v1774 = vadd.f32 %v1734, %v1738
        %v1775 = vadd.f32 %v1774, %v1742
        %v1776 = vadd.f32 %v1775, %v1746
        %v1777 = vrot.slane %v1776, 4
        %v1778 = vadd.f32 %v1776, %v1777
        %v1779 = vrot.slane %v1778, 2
        %v1780 = vadd.f32 %v1778, %v1779
        %v1781 = vrot.slane %v1780, 1
        %v1782 = vadd.f32 %v1780, %v1781
        %v1787 = vcombine.low %v1755, %v1764
        %v1788 = vcombine.low %v1773, %v1782
        %v1790 = vunpack.c.l.s4 1966171168
        %v1791 = vunpack.c.0.s8 %v1790
        %v1792 = vlaneseq
        %v1793 = vshrl.u32 %v1792, 7
        %v1794 = vsub.s32 %v1791, %v1793
        %v1795 = vrot.slane %v1787, %v1794
        %v1797 = vunpack.c.l.s4 1966171168
        %v1798 = vunpack.c.0.s8 %v1797
        %v1799 = vlaneseq
        %v1800 = vshrl.u32 %v1799, 7
        %v1801 = vsub.s32 %v1798, %v1800
        %v1802 = vrot.slane %v1788, %v1801
        %v1803 = vcombine.low %v1795, %v1802
        %v1805 = vunpack.c.l.s4 1966171168
        %v1806 = vunpack.c.0.s8 %v1805
        %v1807 = vlaneseq
        %v1808 = vshrl.u32 %v1807, 7
        %v1809 = vsub.s32 %v1806, %v1808
        %v1810 = vrot.slane %v1803, %v1809
        %v1812 = vlaneseq
        %vm1813 = vcmp.ge.s32.totalorder %v1812, 0
        %vm1814 = vcmp.lt.s32.totalorder %v1812, 512
        %vm1815 = vmand %vm1813, %vm1814
        %1816 = vst.msk [vmem:[%s242] sm:$0xf] %vm1815, %v1810
        %s1817 = sand.u32 %s104, 1
        %s1818 = scalar_lea.sflag [#allocation4], %s1817
        %s1819 = sand.u32 %s104, 1
        %s1820 = smul.addr %s1819, 4
        %s1821 = scalar_lea.vmem [#allocation8], %s1820
        // Predicated region
        $region45: #{tpu_custom_call.1} parent=31 // pred_check
          %p1822 = pneg %p114
        $region46: #{tpu_custom_call.1} parent=31 // pred_check_branch
          %1824 = sbr.rel (%p1822) target = $region48
        $region47: #{tpu_custom_call.1} parent=31 // pred_region
          %s1825 = smul.u32 4, %s23
          %s1827 = ssub.s32 64, 64
          %1828 = vsyncadd %s1818, %s1827
          %s1829 = smul.addr %s1825, 16
          %s1830 = scalar_lea.hbm %s3, %s1829
          %s1832 = sshll.u32 %s1821, 4
          %s1833 = int_to_ptr.vmem [resolvable:$true] %s1832
          %1835 = dma.vmem_to_hbm [thread:$0]  %s1833, 64, %s1830, %s1818
        $region48: #{tpu_custom_call.1} parent=31 // pred_fallthru
          _
      $region32: #{tpu_custom_call.1} parent=5 // pred_fallthru
        _
      %p1836 = scmp.le.s32.totalorder 2, %s18
      // Predicated region
      $region49: #{tpu_custom_call.1} parent=5 // pred_check
        %p1837 = pneg %p1836
      $region50: #{tpu_custom_call.1} parent=5 // pred_check_branch
        %1839 = sbr.rel (%p1837) target = $region52
      $region51: #{tpu_custom_call.1} parent=5 // pred_region
        %s1840 = ssub.s32 %s18, 2
        // Predicated region
        $region53: #{tpu_custom_call.1} parent=51 // pred_check
          %p1841 = pneg %p120
        $region54: #{tpu_custom_call.1} parent=51 // pred_check_branch
          %1843 = sbr.rel (%p1841) target = $region56
        $region55: #{tpu_custom_call.1} parent=51 // pred_region
          %s1844 = sand.u32 %s105, 1
          %s1845 = scalar_lea.sflag [#allocation4], %s1844
          %s1846 = sand.u32 %s105, 1
          %s1847 = smul.addr %s1846, 4
          %s1848 = scalar_lea.vmem [#allocation8], %s1847
          %1849 = dma.done %s1845, 64
        $region56: #{tpu_custom_call.1} parent=51 // pred_fallthru
          _
      $region52: #{tpu_custom_call.1} parent=5 // pred_fallthru
        _
    $region6: #{tpu_custom_call.1} parent=1 // loop_footer
      %s22 = sadd.s32 1, %s18
    $region7: #{tpu_custom_call.1} parent=1 // loop_footer_branch
      %17 = sbr.rel target = $region3
    $region8: #{tpu_custom_call.1} parent=1 // loop_exit
      _
    %1850 = vsyncpa [#allocation3], 1
    %s1851 = scalar_lea.sflag [#allocation3], 1
    %1852 = vsyncpa %s1851, 1
    %1853 = vsyncpa [#allocation6], 1
    %s1854 = scalar_lea.sflag [#allocation6], 1
    %1855 = vsyncpa %s1854, 1
    %1856 = vsyncpa [#allocation4], 1
    %s1857 = scalar_lea.sflag [#allocation4], 1
    %1858 = vsyncpa %s1857, 1

</llo_original>
